<compile_context>
chip_gen: v6e
topology: v6e:2x2x1
jax: 0.10.0
libtpu: 0.0.40
codegen_flags: <defaults>
</compile_context>

<pallas_src>
import jax
import jax.numpy as jnp
import numpy as np
from jax.experimental import pallas as pl
from jax.experimental.pallas import tpu as pltpu

# ----------------------------- model config ---------------------------------
B = 2          # batch
L = 16         # seq_len
E = 32         # embed_dim
D_QKV = 8      # d_qkv
H = 4          # n_heads
D_FF = 64      # d_ff
SCALE = D_QKV ** 0.5
INV_SCALE = 1.0 / SCALE
MASK_VALUE = -1e30          # additive mask for cross-batch score blocks


def alibi_matrix_np(n, n_heads):
    """Non-causal ALiBi bias, shape (n_heads, n, n), float32 (matches spec)."""
    dists = np.array([[-abs(j - i) for i in range(n)] for j in range(n)],
                     dtype=np.float32)
    slopes = np.array([2.0 ** (-x) for x in np.linspace(1, 8, n_heads)],
                      dtype=np.float32)
    return (slopes[:, None, None] * dists[None, :, :]).astype(np.float32)


# ------------------------------- kernel -------------------------------------
def encoder_block_kernel(x_ref, wq_ref, wk_ref, wv_ref, bq_ref, bk_ref, bv_ref,
                         wo_ref, bo_ref, am_ref, ww_ref, wvf_ref, wout_ref,
                         o_ref):
    f32 = jnp.float32
    x2 = x_ref[...]                                        # (B*L, E)

    # --- attention sublayer: X + Attn(RMSNorm(X)) ---
    # RMSNorm (no eps / no gamma, faithful to the PyTorch module); rsqrt -> EUP.
    xn2 = x2 * jax.lax.rsqrt(jnp.mean(x2 * x2, axis=-1, keepdims=True))

    # All-head projections: 3 MXU pushes.  1/sqrt(d_qkv) is folded into
    # wq/bq offline, so scores need no explicit scaling.
    q2 = jnp.dot(xn2, wq_ref[...], preferred_element_type=f32) + bq_ref[...]
    k2 = jnp.dot(xn2, wk_ref[...], preferred_element_type=f32) + bk_ref[...]
    v2 = jnp.dot(xn2, wv_ref[...], preferred_element_type=f32) + bv_ref[...]

    # Per-head scores over the batch-merged (B*L, B*L) token axis.  am_ref
    # holds ALiBi on the two in-batch diagonal blocks and -1e30 on the
    # cross-batch blocks, so one stacked softmax handles both batch elements.
    dn = (((1,), (1,)), ((), ()))          # contract last dims: 'ld,md->lm'
    s = jnp.stack(
        [jax.lax.dot_general(q2[:, h * D_QKV:(h + 1) * D_QKV],
                             k2[:, h * D_QKV:(h + 1) * D_QKV], dn,
                             preferred_element_type=f32)
         for h in range(H)],
        axis=0)                                            # (H, B*L, B*L)
    s = s + am_ref[...]

    # Single stacked softmax (1x max / exp / sum / reciprocal for all heads).
    s = s - jnp.max(s, axis=-1, keepdims=True)
    p = jnp.exp(s)
    p = p * pl.reciprocal(jnp.sum(p, axis=-1, keepdims=True), approx=True)

    # Weighted values per head; cross-batch weights are exactly zero so the
    # merged token axis is safe.  Heads are reassembled lane-contiguously
    # (column h*D+d) so a single (B*L, H*D) @ (H*D, E) out-projection suffices.
    o2 = jnp.concatenate(
        [jnp.dot(p[h], v2[:, h * D_QKV:(h + 1) * D_QKV],
                 preferred_element_type=f32)
         for h in range(H)],
        axis=1)                                            # (B*L, H*D)
    y2 = x2 + jnp.dot(o2, wo_ref[...], preferred_element_type=f32) + bo_ref[...]

    # --- FFN sublayer: Y + FFN(RMSNorm(Y)) ---
    yn2 = y2 * jax.lax.rsqrt(jnp.mean(y2 * y2, axis=-1, keepdims=True))
    g = jnp.dot(yn2, ww_ref[...], preferred_element_type=f32)    # (B*L, D_FF)
    u = jnp.dot(yn2, wvf_ref[...], preferred_element_type=f32)   # (B*L, D_FF)
    # TODO(synk): switch to approximate=False (erf) if exact-GELU parity below
    # ~1e-4 is ever required; tanh form keeps the transcendental on the EUP.
    z = jnp.dot(jax.nn.gelu(g, approximate=True) * u, wout_ref[...],
                preferred_element_type=f32)                      # (B*L, E)

    o_ref[...] = y2 + z


# --------------------- one-time parameter preparation ------------------------
def prepare_params(wqkv, bqkv, wo, bo, alibi, ww, wv, wout):
    """Init-time weight re-layout, hoisted out of the per-call jitted path."""
    # to_qkv column f = h*(3*D) + c*D + d  (c: 0=Q, 1=K, 2=V), as implied by the
    # PyTorch rearrange 'b l (h ddd)' + chunk(3, dim=-1).
    wqkv4 = wqkv.reshape(E, H, 3, D_QKV)
    wq = (wqkv4[:, :, 0, :] * INV_SCALE).reshape(E, H * D_QKV)   # scale folded
    wk = wqkv4[:, :, 1, :].reshape(E, H * D_QKV)
    wv_att = wqkv4[:, :, 2, :].reshape(E, H * D_QKV)
    bqkv3 = bqkv.reshape(H, 3, D_QKV)
    bq = (bqkv3[:, 0, :] * INV_SCALE).reshape(1, H * D_QKV)
    bk = bqkv3[:, 1, :].reshape(1, H * D_QKV)
    bv = bqkv3[:, 2, :].reshape(1, H * D_QKV)

    # Block-diagonal additive matrix over the batch-merged token axis:
    # in-batch blocks carry ALiBi, cross-batch blocks carry -1e30.
    am = np.full((H, B * L, B * L), MASK_VALUE, dtype=np.float32)
    alibi_np = np.asarray(alibi)
    for b in range(B):
        am[:, b * L:(b + 1) * L, b * L:(b + 1) * L] = alibi_np
    am = jnp.asarray(am)

    # wo rows are already head-major (h*D + d); ww/wv/wout pass through.
    return (wq, wk, wv_att, bq, bk, bv, wo, bo, am, ww, wv, wout)


# ------------------------------ wrapper --------------------------------------
@jax.jit
def encoder_block(x, wq, wk, wv, bq, bk, bv, wo, bo, am, ww, wvf, wout):
    x2 = x.reshape(B * L, E)            # trivial contiguous reshape, per call
    args = (x2, wq, wk, wv, bq, bk, bv, wo, bo, am, ww, wvf, wout)

    def full_spec(a):
        nd = a.ndim
        return pl.BlockSpec(a.shape, lambda i: (0,) * nd)

    out2 = pl.pallas_call(
        encoder_block_kernel,
        out_shape=jax.ShapeDtypeStruct((B * L, E), jnp.float32),
        grid_spec=pltpu.PrefetchScalarGridSpec(
            num_scalar_prefetch=0,
            grid=(1,),                          # whole problem in one step
            in_specs=[full_spec(a) for a in args],
            out_specs=pl.BlockSpec((B * L, E), lambda i: (0, 0)),
        ),
        compiler_params=pltpu.CompilerParams(
            dimension_semantics=("arbitrary",)),
    )(*args)
    return out2.reshape(B, L, E)


# --------------------------- pure-JAX reference ------------------------------
def encoder_block_ref(x, wqkv, bqkv, wo, bo, alibi, ww, wv, wout):
    def rmsnorm(t):
        rms = jnp.sqrt(jnp.mean(t * t, axis=-1, keepdims=True))
        return t / rms

    xn = rmsnorm(x)
    qkv = xn @ wqkv + bqkv[0]                               # (B, L, 3*H*D)
    qkv = qkv.reshape(B, L, H, 3 * D_QKV)
    q, k, v = jnp.split(qkv, 3, axis=-1)                    # each (B, L, H, D)
    q = jnp.transpose(q, (0, 2, 1, 3))
    k = jnp.transpose(k, (0, 2, 1, 3))
    v = jnp.transpose(v, (0, 2, 1, 3))
    s = jnp.einsum("bhld,bhmd->bhlm", q, k) / SCALE + alibi[None]
    p = jax.nn.softmax(s, axis=-1)
    ao = jnp.einsum("bhlm,bhmd->bhld", p, v)
    ao = jnp.transpose(ao, (0, 2, 1, 3)).reshape(B, L, H * D_QKV)
    y = x + (ao @ wo + bo[0])

    yn = rmsnorm(y)
    z = (jax.nn.gelu(yn @ ww, approximate=False) * (yn @ wv)) @ wout
    return y + z


# -------------------------------- main ---------------------------------------
if __name__ == "__main__":
    key = jax.random.PRNGKey(0)
    ks = jax.random.split(key, 8)

    x = jax.random.normal(ks[0], (B, L, E), dtype=jnp.float32)

    # nn.Linear-equivalent params, stored (in, out); deterministic init.
    wqkv = jax.random.normal(ks[1], (E, 3 * H * D_QKV), jnp.float32) * 0.05
    bqkv = jax.random.normal(ks[2], (1, 3 * H * D_QKV), jnp.float32) * 0.05
    wo = jax.random.normal(ks[3], (H * D_QKV, E), jnp.float32) * 0.05
    bo = jax.random.normal(ks[4], (1, E), jnp.float32) * 0.05
    ww = jax.random.normal(ks[5], (E, D_FF), jnp.float32) * 0.05
    wv = jax.random.normal(ks[6], (E, D_FF), jnp.float32) * 0.05
    wout = jax.random.normal(ks[7], (D_FF, E), jnp.float32) * 0.05

    alibi = jnp.asarray(alibi_matrix_np(L, H))              # (H, L, L)

    # One-time weight re-layout (outside the jitted call path).
    params = prepare_params(wqkv, bqkv, wo, bo, alibi, ww, wv, wout)

    out = encoder_block(x, *params)
    out = jax.block_until_ready(out)

    ref = encoder_block_ref(x, wqkv, bqkv, wo, bo, alibi, ww, wv, wout)
    np.testing.assert_allclose(np.asarray(out), np.asarray(ref),
                               rtol=2e-3, atol=2e-3)
    print("KERNEL_OK")
</pallas_src>

<mosaic_0001>
module attributes {stable_mosaic.version = 11 : i64} {
  func.func @encoder_block_kernel(%arg0: i32, %arg1: memref<32x32xf32, #tpu.memory_space<vmem>>, %arg2: memref<32x32xf32, #tpu.memory_space<vmem>>, %arg3: memref<32x32xf32, #tpu.memory_space<vmem>>, %arg4: memref<32x32xf32, #tpu.memory_space<vmem>>, %arg5: memref<1x32xf32, #tpu.memory_space<vmem>>, %arg6: memref<1x32xf32, #tpu.memory_space<vmem>>, %arg7: memref<1x32xf32, #tpu.memory_space<vmem>>, %arg8: memref<32x32xf32, #tpu.memory_space<vmem>>, %arg9: memref<1x32xf32, #tpu.memory_space<vmem>>, %arg10: memref<4x32x32xf32, #tpu.memory_space<vmem>>, %arg11: memref<32x64xf32, #tpu.memory_space<vmem>>, %arg12: memref<32x64xf32, #tpu.memory_space<vmem>>, %arg13: memref<64x32xf32, #tpu.memory_space<vmem>>, %arg14: memref<32x32xf32, #tpu.memory_space<vmem>>) attributes {dimension_semantics = [#tpu.dimension_semantics<arbitrary>], iteration_bounds = array<i64: 1>, scalar_prefetch = 0 : i64, scratch_operands = 0 : i64, tpu.core_type = #tpu.core_type<tc>, window_params = [{pipeline_mode = #tpu.pipeline_mode<synchronous>, transform_indices = @transform_0, window_bounds = array<i64: 32, 32>}, {pipeline_mode = #tpu.pipeline_mode<synchronous>, transform_indices = @transform_1, window_bounds = array<i64: 32, 32>}, {pipeline_mode = #tpu.pipeline_mode<synchronous>, transform_indices = @transform_2, window_bounds = array<i64: 32, 32>}, {pipeline_mode = #tpu.pipeline_mode<synchronous>, transform_indices = @transform_3, window_bounds = array<i64: 32, 32>}, {pipeline_mode = #tpu.pipeline_mode<synchronous>, transform_indices = @transform_4, window_bounds = array<i64: 1, 32>}, {pipeline_mode = #tpu.pipeline_mode<synchronous>, transform_indices = @transform_5, window_bounds = array<i64: 1, 32>}, {pipeline_mode = #tpu.pipeline_mode<synchronous>, transform_indices = @transform_6, window_bounds = array<i64: 1, 32>}, {pipeline_mode = #tpu.pipeline_mode<synchronous>, transform_indices = @transform_7, window_bounds = array<i64: 32, 32>}, {pipeline_mode = #tpu.pipeline_mode<synchronous>, transform_indices = @transform_8, window_bounds = array<i64: 1, 32>}, {pipeline_mode = #tpu.pipeline_mode<synchronous>, transform_indices = @transform_9, window_bounds = array<i64: 4, 32, 32>}, {pipeline_mode = #tpu.pipeline_mode<synchronous>, transform_indices = @transform_10, window_bounds = array<i64: 32, 64>}, {pipeline_mode = #tpu.pipeline_mode<synchronous>, transform_indices = @transform_11, window_bounds = array<i64: 32, 64>}, {pipeline_mode = #tpu.pipeline_mode<synchronous>, transform_indices = @transform_12, window_bounds = array<i64: 64, 32>}, {pipeline_mode = #tpu.pipeline_mode<synchronous>, transform_indices = @transform_13, window_bounds = array<i64: 32, 32>}]} {
    %c0 = arith.constant 0 : index
    %c0_0 = arith.constant 0 : index
    %0 = vector.load %arg1[%c0, %c0_0] : memref<32x32xf32, #tpu.memory_space<vmem>>, vector<32x32xf32>
    %1 = arith.mulf %0, %0 : vector<32x32xf32>
    %cst = arith.constant dense<0.000000e+00> : vector<32xf32>
    %2 = vector.multi_reduction <add>, %1, %cst [1] : vector<32x32xf32> to vector<32xf32>
    %3 = vector.shape_cast %2 : vector<32xf32> to vector<32x1xf32>
    %cst_1 = arith.constant 3.200000e+01 : f32
    %4 = vector.broadcast %cst_1 : f32 to vector<32x1xf32>
    %5 = arith.divf %3, %4 : vector<32x1xf32>
    %6 = math.rsqrt %5 : vector<32x1xf32>
    %7 = vector.broadcast %6 : vector<32x1xf32> to vector<32x32xf32>
    %8 = arith.mulf %0, %7 : vector<32x32xf32>
    %c0_2 = arith.constant 0 : index
    %c0_3 = arith.constant 0 : index
    %9 = vector.load %arg2[%c0_2, %c0_3] : memref<32x32xf32, #tpu.memory_space<vmem>>, vector<32x32xf32>
    %cst_4 = arith.constant dense<0.000000e+00> : vector<32x32xf32>
    %10 = tpu.matmul %8, %9, %cst_4 {dimension_numbers = #tpu.dot_dimension_numbers<[1], [0], [0], [1], [0, 0, 1, 1], [], []>} : vector<32x32xf32>, vector<32x32xf32>, vector<32x32xf32> -> vector<32x32xf32>
    %c0_5 = arith.constant 0 : index
    %c0_6 = arith.constant 0 : index
    %11 = vector.load %arg5[%c0_5, %c0_6] : memref<1x32xf32, #tpu.memory_space<vmem>>, vector<1x32xf32>
    %12 = vector.broadcast %11 : vector<1x32xf32> to vector<32x32xf32>
    %13 = arith.addf %10, %12 : vector<32x32xf32>
    %c0_7 = arith.constant 0 : index
    %c0_8 = arith.constant 0 : index
    %14 = vector.load %arg3[%c0_7, %c0_8] : memref<32x32xf32, #tpu.memory_space<vmem>>, vector<32x32xf32>
    %cst_9 = arith.constant dense<0.000000e+00> : vector<32x32xf32>
    %15 = tpu.matmul %8, %14, %cst_9 {dimension_numbers = #tpu.dot_dimension_numbers<[1], [0], [0], [1], [0, 0, 1, 1], [], []>} : vector<32x32xf32>, vector<32x32xf32>, vector<32x32xf32> -> vector<32x32xf32>
    %c0_10 = arith.constant 0 : index
    %c0_11 = arith.constant 0 : index
    %16 = vector.load %arg6[%c0_10, %c0_11] : memref<1x32xf32, #tpu.memory_space<vmem>>, vector<1x32xf32>
    %17 = vector.broadcast %16 : vector<1x32xf32> to vector<32x32xf32>
    %18 = arith.addf %15, %17 : vector<32x32xf32>
    %c0_12 = arith.constant 0 : index
    %c0_13 = arith.constant 0 : index
    %19 = vector.load %arg4[%c0_12, %c0_13] : memref<32x32xf32, #tpu.memory_space<vmem>>, vector<32x32xf32>
    %cst_14 = arith.constant dense<0.000000e+00> : vector<32x32xf32>
    %20 = tpu.matmul %8, %19, %cst_14 {dimension_numbers = #tpu.dot_dimension_numbers<[1], [0], [0], [1], [0, 0, 1, 1], [], []>} : vector<32x32xf32>, vector<32x32xf32>, vector<32x32xf32> -> vector<32x32xf32>
    %c0_15 = arith.constant 0 : index
    %c0_16 = arith.constant 0 : index
    %21 = vector.load %arg7[%c0_15, %c0_16] : memref<1x32xf32, #tpu.memory_space<vmem>>, vector<1x32xf32>
    %22 = vector.broadcast %21 : vector<1x32xf32> to vector<32x32xf32>
    %23 = arith.addf %20, %22 : vector<32x32xf32>
    %24 = vector.extract_strided_slice %13 {offsets = [0, 0], sizes = [32, 8], strides = [1, 1]} : vector<32x32xf32> to vector<32x8xf32>
    %25 = vector.extract_strided_slice %18 {offsets = [0, 0], sizes = [32, 8], strides = [1, 1]} : vector<32x32xf32> to vector<32x8xf32>
    %cst_17 = arith.constant dense<0.000000e+00> : vector<32x32xf32>
    %26 = tpu.matmul %24, %25, %cst_17 {dimension_numbers = #tpu.dot_dimension_numbers<[1], [1], [0], [0], [0, 0, 1, 0], [], []>} : vector<32x8xf32>, vector<32x8xf32>, vector<32x32xf32> -> vector<32x32xf32>
    %27 = vector.extract_strided_slice %13 {offsets = [0, 8], sizes = [32, 8], strides = [1, 1]} : vector<32x32xf32> to vector<32x8xf32>
    %28 = vector.extract_strided_slice %18 {offsets = [0, 8], sizes = [32, 8], strides = [1, 1]} : vector<32x32xf32> to vector<32x8xf32>
    %cst_18 = arith.constant dense<0.000000e+00> : vector<32x32xf32>
    %29 = tpu.matmul %27, %28, %cst_18 {dimension_numbers = #tpu.dot_dimension_numbers<[1], [1], [0], [0], [0, 0, 1, 0], [], []>} : vector<32x8xf32>, vector<32x8xf32>, vector<32x32xf32> -> vector<32x32xf32>
    %30 = vector.extract_strided_slice %13 {offsets = [0, 16], sizes = [32, 8], strides = [1, 1]} : vector<32x32xf32> to vector<32x8xf32>
    %31 = vector.extract_strided_slice %18 {offsets = [0, 16], sizes = [32, 8], strides = [1, 1]} : vector<32x32xf32> to vector<32x8xf32>
    %cst_19 = arith.constant dense<0.000000e+00> : vector<32x32xf32>
    %32 = tpu.matmul %30, %31, %cst_19 {dimension_numbers = #tpu.dot_dimension_numbers<[1], [1], [0], [0], [0, 0, 1, 0], [], []>} : vector<32x8xf32>, vector<32x8xf32>, vector<32x32xf32> -> vector<32x32xf32>
    %33 = vector.extract_strided_slice %13 {offsets = [0, 24], sizes = [32, 8], strides = [1, 1]} : vector<32x32xf32> to vector<32x8xf32>
    %34 = vector.extract_strided_slice %18 {offsets = [0, 24], sizes = [32, 8], strides = [1, 1]} : vector<32x32xf32> to vector<32x8xf32>
    %cst_20 = arith.constant dense<0.000000e+00> : vector<32x32xf32>
    %35 = tpu.matmul %33, %34, %cst_20 {dimension_numbers = #tpu.dot_dimension_numbers<[1], [1], [0], [0], [0, 0, 1, 0], [], []>} : vector<32x8xf32>, vector<32x8xf32>, vector<32x32xf32> -> vector<32x32xf32>
    %36 = vector.shape_cast %26 : vector<32x32xf32> to vector<1x32x32xf32>
    %37 = vector.shape_cast %29 : vector<32x32xf32> to vector<1x32x32xf32>
    %38 = vector.shape_cast %32 : vector<32x32xf32> to vector<1x32x32xf32>
    %39 = vector.shape_cast %35 : vector<32x32xf32> to vector<1x32x32xf32>
    %40 = tpu.concatenate %36, %37, %38, %39 in 0 : vector<1x32x32xf32>, vector<1x32x32xf32>, vector<1x32x32xf32>, vector<1x32x32xf32> -> vector<4x32x32xf32>
    %c0_21 = arith.constant 0 : index
    %c0_22 = arith.constant 0 : index
    %c0_23 = arith.constant 0 : index
    %41 = vector.load %arg10[%c0_21, %c0_22, %c0_23] : memref<4x32x32xf32, #tpu.memory_space<vmem>>, vector<4x32x32xf32>
    %42 = arith.addf %40, %41 : vector<4x32x32xf32>
    %cst_24 = arith.constant dense<0xFF800000> : vector<4x32xf32>
    %43 = vector.multi_reduction <maximumf>, %42, %cst_24 [2] : vector<4x32x32xf32> to vector<4x32xf32>
    %44 = vector.shape_cast %43 : vector<4x32xf32> to vector<4x32x1xf32>
    %45 = vector.broadcast %44 : vector<4x32x1xf32> to vector<4x32x32xf32>
    %46 = arith.subf %42, %45 : vector<4x32x32xf32>
    %47 = math.exp %46 : vector<4x32x32xf32>
    %cst_25 = arith.constant dense<0.000000e+00> : vector<4x32xf32>
    %48 = vector.multi_reduction <add>, %47, %cst_25 [2] : vector<4x32x32xf32> to vector<4x32xf32>
    %49 = vector.shape_cast %48 : vector<4x32xf32> to vector<4x32x1xf32>
    %50 = tpu.reciprocal %49 {approx = true} : vector<4x32x1xf32> -> vector<4x32x1xf32>
    %51 = vector.broadcast %50 : vector<4x32x1xf32> to vector<4x32x32xf32>
    %52 = arith.mulf %47, %51 : vector<4x32x32xf32>
    %53 = vector.extract_strided_slice %52 {offsets = [0, 0, 0], sizes = [1, 32, 32], strides = [1, 1, 1]} : vector<4x32x32xf32> to vector<1x32x32xf32>
    %54 = vector.shape_cast %53 : vector<1x32x32xf32> to vector<32x32xf32>
    %55 = vector.extract_strided_slice %23 {offsets = [0, 0], sizes = [32, 8], strides = [1, 1]} : vector<32x32xf32> to vector<32x8xf32>
    %cst_26 = arith.constant dense<0.000000e+00> : vector<32x8xf32>
    %56 = tpu.matmul %54, %55, %cst_26 {dimension_numbers = #tpu.dot_dimension_numbers<[1], [0], [0], [1], [0, 0, 1, 1], [], []>} : vector<32x32xf32>, vector<32x8xf32>, vector<32x8xf32> -> vector<32x8xf32>
    %57 = vector.extract_strided_slice %52 {offsets = [1, 0, 0], sizes = [1, 32, 32], strides = [1, 1, 1]} : vector<4x32x32xf32> to vector<1x32x32xf32>
    %58 = vector.shape_cast %57 : vector<1x32x32xf32> to vector<32x32xf32>
    %59 = vector.extract_strided_slice %23 {offsets = [0, 8], sizes = [32, 8], strides = [1, 1]} : vector<32x32xf32> to vector<32x8xf32>
    %cst_27 = arith.constant dense<0.000000e+00> : vector<32x8xf32>
    %60 = tpu.matmul %58, %59, %cst_27 {dimension_numbers = #tpu.dot_dimension_numbers<[1], [0], [0], [1], [0, 0, 1, 1], [], []>} : vector<32x32xf32>, vector<32x8xf32>, vector<32x8xf32> -> vector<32x8xf32>
    %61 = vector.extract_strided_slice %52 {offsets = [2, 0, 0], sizes = [1, 32, 32], strides = [1, 1, 1]} : vector<4x32x32xf32> to vector<1x32x32xf32>
    %62 = vector.shape_cast %61 : vector<1x32x32xf32> to vector<32x32xf32>
    %63 = vector.extract_strided_slice %23 {offsets = [0, 16], sizes = [32, 8], strides = [1, 1]} : vector<32x32xf32> to vector<32x8xf32>
    %cst_28 = arith.constant dense<0.000000e+00> : vector<32x8xf32>
    %64 = tpu.matmul %62, %63, %cst_28 {dimension_numbers = #tpu.dot_dimension_numbers<[1], [0], [0], [1], [0, 0, 1, 1], [], []>} : vector<32x32xf32>, vector<32x8xf32>, vector<32x8xf32> -> vector<32x8xf32>
    %65 = vector.extract_strided_slice %52 {offsets = [3, 0, 0], sizes = [1, 32, 32], strides = [1, 1, 1]} : vector<4x32x32xf32> to vector<1x32x32xf32>
    %66 = vector.shape_cast %65 : vector<1x32x32xf32> to vector<32x32xf32>
    %67 = vector.extract_strided_slice %23 {offsets = [0, 24], sizes = [32, 8], strides = [1, 1]} : vector<32x32xf32> to vector<32x8xf32>
    %cst_29 = arith.constant dense<0.000000e+00> : vector<32x8xf32>
    %68 = tpu.matmul %66, %67, %cst_29 {dimension_numbers = #tpu.dot_dimension_numbers<[1], [0], [0], [1], [0, 0, 1, 1], [], []>} : vector<32x32xf32>, vector<32x8xf32>, vector<32x8xf32> -> vector<32x8xf32>
    %69 = tpu.concatenate %56, %60, %64, %68 in 1 : vector<32x8xf32>, vector<32x8xf32>, vector<32x8xf32>, vector<32x8xf32> -> vector<32x32xf32>
    %c0_30 = arith.constant 0 : index
    %c0_31 = arith.constant 0 : index
    %70 = vector.load %arg8[%c0_30, %c0_31] : memref<32x32xf32, #tpu.memory_space<vmem>>, vector<32x32xf32>
    %cst_32 = arith.constant dense<0.000000e+00> : vector<32x32xf32>
    %71 = tpu.matmul %69, %70, %cst_32 {dimension_numbers = #tpu.dot_dimension_numbers<[1], [0], [0], [1], [0, 0, 1, 1], [], []>} : vector<32x32xf32>, vector<32x32xf32>, vector<32x32xf32> -> vector<32x32xf32>
    %72 = arith.addf %0, %71 : vector<32x32xf32>
    %c0_33 = arith.constant 0 : index
    %c0_34 = arith.constant 0 : index
    %73 = vector.load %arg9[%c0_33, %c0_34] : memref<1x32xf32, #tpu.memory_space<vmem>>, vector<1x32xf32>
    %74 = vector.broadcast %73 : vector<1x32xf32> to vector<32x32xf32>
    %75 = arith.addf %72, %74 : vector<32x32xf32>
    %76 = arith.mulf %75, %75 : vector<32x32xf32>
    %cst_35 = arith.constant dense<0.000000e+00> : vector<32xf32>
    %77 = vector.multi_reduction <add>, %76, %cst_35 [1] : vector<32x32xf32> to vector<32xf32>
    %78 = vector.shape_cast %77 : vector<32xf32> to vector<32x1xf32>
    %cst_36 = arith.constant 3.200000e+01 : f32
    %79 = vector.broadcast %cst_36 : f32 to vector<32x1xf32>
    %80 = arith.divf %78, %79 : vector<32x1xf32>
    %81 = math.rsqrt %80 : vector<32x1xf32>
    %82 = vector.broadcast %81 : vector<32x1xf32> to vector<32x32xf32>
    %83 = arith.mulf %75, %82 : vector<32x32xf32>
    %c0_37 = arith.constant 0 : index
    %c0_38 = arith.constant 0 : index
    %84 = vector.load %arg11[%c0_37, %c0_38] : memref<32x64xf32, #tpu.memory_space<vmem>>, vector<32x64xf32>
    %cst_39 = arith.constant dense<0.000000e+00> : vector<32x64xf32>
    %85 = tpu.matmul %83, %84, %cst_39 {dimension_numbers = #tpu.dot_dimension_numbers<[1], [0], [0], [1], [0, 0, 1, 1], [], []>} : vector<32x32xf32>, vector<32x64xf32>, vector<32x64xf32> -> vector<32x64xf32>
    %c0_40 = arith.constant 0 : index
    %c0_41 = arith.constant 0 : index
    %86 = vector.load %arg12[%c0_40, %c0_41] : memref<32x64xf32, #tpu.memory_space<vmem>>, vector<32x64xf32>
    %cst_42 = arith.constant dense<0.000000e+00> : vector<32x64xf32>
    %87 = tpu.matmul %83, %86, %cst_42 {dimension_numbers = #tpu.dot_dimension_numbers<[1], [0], [0], [1], [0, 0, 1, 1], [], []>} : vector<32x32xf32>, vector<32x64xf32>, vector<32x64xf32> -> vector<32x64xf32>
    %88 = arith.mulf %85, %85 : vector<32x64xf32>
    %89 = arith.mulf %85, %88 : vector<32x64xf32>
    %cst_43 = arith.constant 4.471500e-02 : f32
    %90 = vector.broadcast %cst_43 : f32 to vector<32x64xf32>
    %91 = arith.mulf %90, %89 : vector<32x64xf32>
    %92 = arith.addf %85, %91 : vector<32x64xf32>
    %cst_44 = arith.constant 0.797884583 : f32
    %93 = vector.broadcast %cst_44 : f32 to vector<32x64xf32>
    %94 = arith.mulf %93, %92 : vector<32x64xf32>
    %95 = math.tanh %94 : vector<32x64xf32>
    %cst_45 = arith.constant 1.000000e+00 : f32
    %96 = vector.broadcast %cst_45 : f32 to vector<32x64xf32>
    %97 = arith.addf %96, %95 : vector<32x64xf32>
    %cst_46 = arith.constant 5.000000e-01 : f32
    %98 = vector.broadcast %cst_46 : f32 to vector<32x64xf32>
    %99 = arith.mulf %98, %97 : vector<32x64xf32>
    %100 = arith.mulf %85, %99 : vector<32x64xf32>
    %101 = arith.mulf %100, %87 : vector<32x64xf32>
    %c0_47 = arith.constant 0 : index
    %c0_48 = arith.constant 0 : index
    %102 = vector.load %arg13[%c0_47, %c0_48] : memref<64x32xf32, #tpu.memory_space<vmem>>, vector<64x32xf32>
    %cst_49 = arith.constant dense<0.000000e+00> : vector<32x32xf32>
    %103 = tpu.matmul %101, %102, %cst_49 {dimension_numbers = #tpu.dot_dimension_numbers<[1], [0], [0], [1], [0, 0, 1, 1], [], []>} : vector<32x64xf32>, vector<64x32xf32>, vector<32x32xf32> -> vector<32x32xf32>
    %104 = arith.addf %75, %103 : vector<32x32xf32>
    %c0_50 = arith.constant 0 : index
    %c0_51 = arith.constant 0 : index
    %105 = vector.load %arg14[%c0_50, %c0_51] : memref<32x32xf32, #tpu.memory_space<vmem>>, vector<32x32xf32>
    tpu.vector_store %arg14[%c0_50, %c0_51], %104 {strides = array<i32>} : memref<32x32xf32, #tpu.memory_space<vmem>>, vector<32x32xf32>,
    return
  }
  func.func @transform_0(%arg0: i32) -> (i32, i32) {
    %c0_i32 = arith.constant 0 : i32
    %c0_i32_0 = arith.constant 0 : i32
    %c0_i32_1 = arith.constant 0 : i32
    return %c0_i32, %c0_i32_0 : i32, i32
  }
  func.func @transform_1(%arg0: i32) -> (i32, i32) {
    %c0_i32 = arith.constant 0 : i32
    %c0_i32_0 = arith.constant 0 : i32
    %c0_i32_1 = arith.constant 0 : i32
    return %c0_i32, %c0_i32_0 : i32, i32
  }
  func.func @transform_2(%arg0: i32) -> (i32, i32) {
    %c0_i32 = arith.constant 0 : i32
    %c0_i32_0 = arith.constant 0 : i32
    %c0_i32_1 = arith.constant 0 : i32
    return %c0_i32, %c0_i32_0 : i32, i32
  }
  func.func @transform_3(%arg0: i32) -> (i32, i32) {
    %c0_i32 = arith.constant 0 : i32
    %c0_i32_0 = arith.constant 0 : i32
    %c0_i32_1 = arith.constant 0 : i32
    return %c0_i32, %c0_i32_0 : i32, i32
  }
  func.func @transform_4(%arg0: i32) -> (i32, i32) {
    %c0_i32 = arith.constant 0 : i32
    %c0_i32_0 = arith.constant 0 : i32
    %c0_i32_1 = arith.constant 0 : i32
    return %c0_i32, %c0_i32_0 : i32, i32
  }
  func.func @transform_5(%arg0: i32) -> (i32, i32) {
    %c0_i32 = arith.constant 0 : i32
    %c0_i32_0 = arith.constant 0 : i32
    %c0_i32_1 = arith.constant 0 : i32
    return %c0_i32, %c0_i32_0 : i32, i32
  }
  func.func @transform_6(%arg0: i32) -> (i32, i32) {
    %c0_i32 = arith.constant 0 : i32
    %c0_i32_0 = arith.constant 0 : i32
    %c0_i32_1 = arith.constant 0 : i32
    return %c0_i32, %c0_i32_0 : i32, i32
  }
  func.func @transform_7(%arg0: i32) -> (i32, i32) {
    %c0_i32 = arith.constant 0 : i32
    %c0_i32_0 = arith.constant 0 : i32
    %c0_i32_1 = arith.constant 0 : i32
    return %c0_i32, %c0_i32_0 : i32, i32
  }
  func.func @transform_8(%arg0: i32) -> (i32, i32) {
    %c0_i32 = arith.constant 0 : i32
    %c0_i32_0 = arith.constant 0 : i32
    %c0_i32_1 = arith.constant 0 : i32
    return %c0_i32, %c0_i32_0 : i32, i32
  }
  func.func @transform_9(%arg0: i32) -> (i32, i32, i32) {
    %c0_i32 = arith.constant 0 : i32
    %c0_i32_0 = arith.constant 0 : i32
    %c0_i32_1 = arith.constant 0 : i32
    %c0_i32_2 = arith.constant 0 : i32
    return %c0_i32, %c0_i32_0, %c0_i32_1 : i32, i32, i32
  }
  func.func @transform_10(%arg0: i32) -> (i32, i32) {
    %c0_i32 = arith.constant 0 : i32
    %c0_i32_0 = arith.constant 0 : i32
    %c0_i32_1 = arith.constant 0 : i32
    return %c0_i32, %c0_i32_0 : i32, i32
  }
  func.func @transform_11(%arg0: i32) -> (i32, i32) {
    %c0_i32 = arith.constant 0 : i32
    %c0_i32_0 = arith.constant 0 : i32
    %c0_i32_1 = arith.constant 0 : i32
    return %c0_i32, %c0_i32_0 : i32, i32
  }
  func.func @transform_12(%arg0: i32) -> (i32, i32) {
    %c0_i32 = arith.constant 0 : i32
    %c0_i32_0 = arith.constant 0 : i32
    %c0_i32_1 = arith.constant 0 : i32
    return %c0_i32, %c0_i32_0 : i32, i32
  }
  func.func @transform_13(%arg0: i32) -> (i32, i32) {
    %c0_i32 = arith.constant 0 : i32
    %c0_i32_0 = arith.constant 0 : i32
    %c0_i32_1 = arith.constant 0 : i32
    return %c0_i32, %c0_i32_0 : i32, i32
  }
}

</mosaic_0001>

<llo_original>
// kernel: encoder_block.1
$region0: #{encoder_block.1}
  #allocation0 [shape = 'u32[]', space=smem, size = 0x4, offset = 0x4, fixed_abs, tag = 'smem constant byte address 0x4 - core index']
  #allocation1 [shape = 'u32[144,128]{1,0:T(1,128)}', space=vmem, size = 0x12000, scoped, tag = 'internal scratch']
  %s0 = inlined_call_operand.vmem [shape: f32[32,32], index: 0, kind: input, shape index: {}]
  %s1 = inlined_call_operand.vmem [shape: f32[32,32], index: 1, kind: input, shape index: {}]
  %s2 = inlined_call_operand.vmem [shape: f32[32,32], index: 2, kind: input, shape index: {}]
  %s3 = inlined_call_operand.hbm [shape: f32[32,32], index: 3, kind: input, shape index: {}]
  %s4 = inlined_call_operand.vmem [shape: f32[1,32], index: 4, kind: input, shape index: {}]
  %s5 = inlined_call_operand.vmem [shape: f32[1,32], index: 5, kind: input, shape index: {}]
  %s6 = inlined_call_operand.vmem [shape: f32[1,32], index: 6, kind: input, shape index: {}]
  %s7 = inlined_call_operand.hbm [shape: f32[32,32], index: 7, kind: input, shape index: {}]
  %s8 = inlined_call_operand.vmem [shape: f32[1,32], index: 8, kind: input, shape index: {}]
  %s9 = inlined_call_operand.hbm [shape: f32[4,32,32], index: 9, kind: input, shape index: {}]
  %s10 = inlined_call_operand.hbm [shape: f32[32,64], index: 10, kind: input, shape index: {}]
  %s11 = inlined_call_operand.hbm [shape: f32[32,64], index: 11, kind: input, shape index: {}]
  %s12 = inlined_call_operand.vmem [shape: f32[64,32], index: 12, kind: input, shape index: {}]
  %s13 = inlined_call_operand.hbm [shape: f32[32,32], index: 13, kind: output, shape index: {}]
  %s14 = sld [smem:[#allocation0]]
  $region82: #{encoder_block.1} parent=0
    _
  %s16 = ssub.s32 1, %s14
  %s17 = scalar_select 0, %s16, %s14
  $region1: #{encoder_block.1} parent=0
    #allocation2 [shape = 'u8[16384]{0}', space=vmem, size = 0x4000, scoped, tag = 'input window, operand 3, single buffered']
    #allocation3 [shape = 's32[1]{0}', space=sflag, size = 0x4, scoped, tag = 'scoped memory for encoder_block.1']
    #allocation4 [shape = 's32[1]{0}', space=sflag, size = 0x4, scoped, tag = 'scoped memory for encoder_block.1']
    #allocation5 [shape = 'u8[16384]{0}', space=vmem, size = 0x4000, scoped, tag = 'input window, operand 7, single buffered']
    #allocation6 [shape = 's32[1]{0}', space=sflag, size = 0x4, scoped, tag = 'scoped memory for encoder_block.1']
    #allocation7 [shape = 'u8[65536]{0}', space=vmem, size = 0x10000, scoped, tag = 'input window, operand 9, single buffered']
    #allocation8 [shape = 'u8[16384]{0}', space=vmem, size = 0x4000, scoped, tag = 'input window, operand 10, single buffered']
    #allocation9 [shape = 's32[1]{0}', space=sflag, size = 0x4, scoped, tag = 'scoped memory for encoder_block.1']
    #allocation10 [shape = 'u8[16384]{0}', space=vmem, size = 0x4000, scoped, tag = 'input window, operand 11, single buffered']
    #allocation11 [shape = 'u8[16384]{0}', space=vmem, size = 0x4000, scoped, tag = 'output window, operand 0, single buffered']
    %18 = vsyncpa [#allocation3], 0
    %19 = vsyncpa [#allocation6], 0
    %20 = vsyncpa [#allocation9], 0
    %21 = vsyncpa [#allocation4], 0
    // Predicated region
    $region2: #{encoder_block.1} parent=1 // pred_check
      _
    $region3: #{encoder_block.1} parent=1 // pred_check_branch
      %23 = sbr.rel (0) target = $region5
    $region4: #{encoder_block.1} parent=1 // pred_region
      _
    $region5: #{encoder_block.1} parent=1 // pred_fallthru
      _
    // Predicated region
    $region6: #{encoder_block.1} parent=1 // pred_check
      _
    $region7: #{encoder_block.1} parent=1 // pred_check_branch
      %25 = sbr.rel (0) target = $region9
    $region8: #{encoder_block.1} parent=1 // pred_region
      _
    $region9: #{encoder_block.1} parent=1 // pred_fallthru
      _
    // Predicated region
    $region10: #{encoder_block.1} parent=1 // pred_check
      _
    $region11: #{encoder_block.1} parent=1 // pred_check_branch
      %27 = sbr.rel (0) target = $region13
    $region12: #{encoder_block.1} parent=1 // pred_region
      _
    $region13: #{encoder_block.1} parent=1 // pred_fallthru
      _
    // Predicated region
    $region14: #{encoder_block.1} parent=1 // pred_check
      _
    $region15: #{encoder_block.1} parent=1 // pred_check_branch
      %29 = sbr.rel (0) target = $region17
    $region16: #{encoder_block.1} parent=1 // pred_region
      %s31 = ssub.s32 512, 512
      %32 = vsyncadd [#allocation3], %s31
      %s33 = sshll.u32 [#allocation2], 4
      %s34 = int_to_ptr.vmem [resolvable:$true] %s33
      %39 = dma.hbm_to_vmem [thread:$0]  %s3, 512, %s34, [#allocation3], 128, 128, 8
    $region17: #{encoder_block.1} parent=1 // pred_fallthru
      _
    // Predicated region
    $region18: #{encoder_block.1} parent=1 // pred_check
      _
    $region19: #{encoder_block.1} parent=1 // pred_check_branch
      %41 = sbr.rel (0) target = $region21
    $region20: #{encoder_block.1} parent=1 // pred_region
      _
    $region21: #{encoder_block.1} parent=1 // pred_fallthru
      _
    // Predicated region
    $region22: #{encoder_block.1} parent=1 // pred_check
      _
    $region23: #{encoder_block.1} parent=1 // pred_check_branch
      %43 = sbr.rel (0) target = $region25
    $region24: #{encoder_block.1} parent=1 // pred_region
      _
    $region25: #{encoder_block.1} parent=1 // pred_fallthru
      _
    // Predicated region
    $region26: #{encoder_block.1} parent=1 // pred_check
      _
    $region27: #{encoder_block.1} parent=1 // pred_check_branch
      %45 = sbr.rel (0) target = $region29
    $region28: #{encoder_block.1} parent=1 // pred_region
      _
    $region29: #{encoder_block.1} parent=1 // pred_fallthru
      _
    // Predicated region
    $region30: #{encoder_block.1} parent=1 // pred_check
      _
    $region31: #{encoder_block.1} parent=1 // pred_check_branch
      %47 = sbr.rel (0) target = $region33
    $region32: #{encoder_block.1} parent=1 // pred_region
      %s49 = ssub.s32 512, 512
      %50 = vsyncadd [#allocation6], %s49
      %s51 = sshll.u32 [#allocation5], 4
      %s52 = int_to_ptr.vmem [resolvable:$true] %s51
      %57 = dma.hbm_to_vmem [thread:$0]  %s7, 512, %s52, [#allocation6], 128, 128, 8
    $region33: #{encoder_block.1} parent=1 // pred_fallthru
      _
    // Predicated region
    $region34: #{encoder_block.1} parent=1 // pred_check
      _
    $region35: #{encoder_block.1} parent=1 // pred_check_branch
      %59 = sbr.rel (0) target = $region37
    $region36: #{encoder_block.1} parent=1 // pred_region
      _
    $region37: #{encoder_block.1} parent=1 // pred_fallthru
      _
    // Predicated region
    $region38: #{encoder_block.1} parent=1 // pred_check
      _
    $region39: #{encoder_block.1} parent=1 // pred_check_branch
      %61 = sbr.rel (0) target = $region41
    $region40: #{encoder_block.1} parent=1 // pred_region
      %s63 = ssub.s32 2048, 2048
      %64 = vsyncadd [#allocation6], %s63
      %s65 = sshll.u32 [#allocation7], 4
      %s66 = int_to_ptr.vmem [resolvable:$true] %s65
      %71 = dma.hbm_to_vmem [thread:$0]  %s9, 2048, %s66, [#allocation6], 128, 128, 8
    $region41: #{encoder_block.1} parent=1 // pred_fallthru
      _
    // Predicated region
    $region42: #{encoder_block.1} parent=1 // pred_check
      _
    $region43: #{encoder_block.1} parent=1 // pred_check_branch
      %73 = sbr.rel (0) target = $region45
    $region44: #{encoder_block.1} parent=1 // pred_region
      %s75 = ssub.s32 512, 512
      %76 = vsyncadd [#allocation9], %s75
      %s77 = sshll.u32 [#allocation8], 4
      %s78 = int_to_ptr.vmem [resolvable:$true] %s77
      %83 = dma.hbm_to_vmem [thread:$0]  %s10, 512, %s78, [#allocation9], 128, 128, 8
    $region45: #{encoder_block.1} parent=1 // pred_fallthru
      _
    // Predicated region
    $region46: #{encoder_block.1} parent=1 // pred_check
      _
    $region47: #{encoder_block.1} parent=1 // pred_check_branch
      %85 = sbr.rel (0) target = $region49
    $region48: #{encoder_block.1} parent=1 // pred_region
      %s87 = ssub.s32 512, 512
      %88 = vsyncadd [#allocation9], %s87
      %s89 = sshll.u32 [#allocation10], 4
      %s90 = int_to_ptr.vmem [resolvable:$true] %s89
      %95 = dma.hbm_to_vmem [thread:$0]  %s11, 512, %s90, [#allocation9], 128, 128, 8
    $region49: #{encoder_block.1} parent=1 // pred_fallthru
      _
    // Predicated region
    $region50: #{encoder_block.1} parent=1 // pred_check
      _
    $region51: #{encoder_block.1} parent=1 // pred_check_branch
      %97 = sbr.rel (0) target = $region53
    $region52: #{encoder_block.1} parent=1 // pred_region
      _
    $region53: #{encoder_block.1} parent=1 // pred_fallthru
      _
    // Predicated region
    $region54: #{encoder_block.1} parent=1 // pred_check
      _
    $region55: #{encoder_block.1} parent=1 // pred_check_branch
      %99 = sbr.rel (0) target = $region57
    $region56: #{encoder_block.1} parent=1 // pred_region
      %100 = dma.done [#allocation3], 512
    $region57: #{encoder_block.1} parent=1 // pred_fallthru
      _
    // Predicated region
    $region58: #{encoder_block.1} parent=1 // pred_check
      _
    $region59: #{encoder_block.1} parent=1 // pred_check_branch
      %102 = sbr.rel (0) target = $region61
    $region60: #{encoder_block.1} parent=1 // pred_region
      %103 = dma.done [#allocation6], 512
    $region61: #{encoder_block.1} parent=1 // pred_fallthru
      _
    // Predicated region
    $region62: #{encoder_block.1} parent=1 // pred_check
      _
    $region63: #{encoder_block.1} parent=1 // pred_check_branch
      %105 = sbr.rel (0) target = $region65
    $region64: #{encoder_block.1} parent=1 // pred_region
      %106 = dma.done [#allocation6], 2048
    $region65: #{encoder_block.1} parent=1 // pred_fallthru
      _
    // Predicated region
    $region66: #{encoder_block.1} parent=1 // pred_check
      _
    $region67: #{encoder_block.1} parent=1 // pred_check_branch
      %108 = sbr.rel (0) target = $region69
    $region68: #{encoder_block.1} parent=1 // pred_region
      %109 = dma.done [#allocation9], 512
    $region69: #{encoder_block.1} parent=1 // pred_fallthru
      _
    // Predicated region
    $region70: #{encoder_block.1} parent=1 // pred_check
      _
    $region71: #{encoder_block.1} parent=1 // pred_check_branch
      %111 = sbr.rel (0) target = $region73
    $region72: #{encoder_block.1} parent=1 // pred_region
      %112 = dma.done [#allocation9], 512
    $region73: #{encoder_block.1} parent=1 // pred_fallthru
      _
    %v113 = vld [vmem:[%s0] sm:$0xff]
    %v114 = vld [vmem:[%s0 + $0x8] sm:$0xff]
    %v115 = vld [vmem:[%s0 + $0x10] sm:$0xff]
    %v116 = vld [vmem:[%s0 + $0x18] sm:$0xff]
    %v117 = vmul.f32 %v113, %v113
    %v118 = vmul.f32 %v114, %v114
    %v119 = vmul.f32 %v115, %v115
    %v120 = vmul.f32 %v116, %v116
    %vm121 = vcmask 261120
    %v122 = vsel %vm121, %v117, 0.0
    %123 = vadd.xlane.f32.xlu0 %v122
    %v124 = vpop.xlane.xlu0 %123
    %v125 = vsel %vm121, %v118, 0.0
    %126 = vadd.xlane.f32.xlu0 %v125
    %v127 = vpop.xlane.xlu0 %126
    %v128 = vsel %vm121, %v119, 0.0
    %129 = vadd.xlane.f32.xlu0 %v128
    %v130 = vpop.xlane.xlu0 %129
    %v131 = vsel %vm121, %v120, 0.0
    %132 = vadd.xlane.f32.xlu0 %v131
    %v133 = vpop.xlane.xlu0 %132
    %v134 = vrcp.pop 32.0
    %v135 = vmul.f32 %v124, %v134
    %v136 = vmul.f32 %v127, %v134
    %v137 = vmul.f32 %v130, %v134
    %v138 = vmul.f32 %v133, %v134
    %v139 = vrsqrt.pop %v135
    %v140 = vrsqrt.pop %v136
    %v141 = vrsqrt.pop %v137
    %v142 = vrsqrt.pop %v138
    %v143 = vmul.f32 %v113, %v139
    %v144 = vmul.f32 %v114, %v140
    %v145 = vmul.f32 %v115, %v141
    %v146 = vmul.f32 %v116, %v142
    %v147 = vld [vmem:[%s1] sm:$0xff]
    %v148 = vld [vmem:[%s1 + $0x8] sm:$0xff]
    %v149 = vld [vmem:[%s1 + $0x10] sm:$0xff]
    %v150 = vld [vmem:[%s1 + $0x18] sm:$0xff]
    %v151 = vld [vmem:[%s4] sm:$0x1]
    %v153 = vlaneseq
    %v154 = vshrl.u32 %v153, 7
    %v155 = vsub.s32 0, %v154
    %v156 = vrot.slane %v151, %v155
    %v159 = vsel %vm121, %v143, 0
    %v162 = vsel %vm121, %v144, 0
    %v165 = vsel %vm121, %v145, 0
    %v168 = vsel %vm121, %v146, 0
    %170 = vmatprep.subr.mxu0 0.0
    %171 = vmatpush1.msra.mxu0 0.0
    %172 = vmatprep.subr.mxu0 0.0
    %173 = vmatpush1.msra.mxu0 0.0
    %174 = vmatprep.subr.mxu0 0.0
    %175 = vmatpush1.msra.mxu0 0.0
    %176 = vmatprep.subr.mxu0 0.0
    %177 = vmatpush1.msra.mxu0 0.0
    %178 = vmatprep.subr.mxu0 0.0
    %179 = vmatpush1.msra.mxu0 0.0
    %180 = vmatprep.subr.mxu0 0.0
    %181 = vmatpush1.msra.mxu0 0.0
    %182 = vmatprep.subr.mxu0 0.0
    %183 = vmatpush1.msra.mxu0 0.0
    %184 = vmatprep.subr.mxu0 0.0
    %185 = vmatpush1.msra.mxu0 0.0
    %186 = vmatprep.subr.mxu0 0.0
    %187 = vmatpush1.msra.mxu0 0.0
    %188 = vmatprep.subr.mxu0 0.0
    %189 = vmatpush1.msra.mxu0 0.0
    %190 = vmatprep.subr.mxu0 0.0
    %191 = vmatpush1.msra.mxu0 0.0
    %192 = vmatprep.subr.mxu0 0.0
    %193 = vmatpush1.msra.mxu0 0.0
    %194 = vmatprep.subr.mxu0 0.0
    %195 = vmatpush1.msra.mxu0 %v150
    %196 = vmatprep.subr.mxu0 0.0
    %197 = vmatpush1.msra.mxu0 %v149
    %198 = vmatprep.subr.mxu0 0.0
    %199 = vmatpush1.msra.mxu0 %v148
    %200 = vmatprep.subr.mxu0 0.0
    %201 = vmatpush1.msra.mxu0 %v147
    %202 = vmatprep.subr.mxu0 0.0
    %203 = vmatpush2.msra.mxu0 0.0
    %204 = vmatprep.subr.mxu0 0.0
    %205 = vmatpush2.msra.mxu0 0.0
    %206 = vmatprep.subr.mxu0 0.0
    %207 = vmatpush2.msra.mxu0 0.0
    %208 = vmatprep.subr.mxu0 0.0
    %209 = vmatpush2.msra.mxu0 0.0
    %210 = vmatprep.subr.mxu0 0.0
    %211 = vmatpush2.msra.mxu0 0.0
    %212 = vmatprep.subr.mxu0 0.0
    %213 = vmatpush2.msra.mxu0 0.0
    %214 = vmatprep.subr.mxu0 0.0
    %215 = vmatpush2.msra.mxu0 0.0
    %216 = vmatprep.subr.mxu0 0.0
    %217 = vmatpush2.msra.mxu0 0.0
    %218 = vmatprep.subr.mxu0 0.0
    %219 = vmatpush2.msra.mxu0 0.0
    %220 = vmatprep.subr.mxu0 0.0
    %221 = vmatpush2.msra.mxu0 0.0
    %222 = vmatprep.subr.mxu0 0.0
    %223 = vmatpush2.msra.mxu0 0.0
    %224 = vmatprep.subr.mxu0 0.0
    %225 = vmatpush2.msra.mxu0 0.0
    %226 = vmatprep.subr.mxu0 0.0
    %227 = vmatpush2.msra.mxu0 0.0
    %228 = vmatprep.subr.mxu0 0.0
    %229 = vmatpush2.msra.mxu0 0.0
    %230 = vmatprep.subr.mxu0 0.0
    %231 = vmatpush2.msra.mxu0 0.0
    %232 = vmatprep.subr.mxu0 0.0
    %233 = vmatpush2.msra.mxu0 0.0
    %234 = vmatprep.mubr.f32.mxu0 0.0
    %235 = vmatmul.mubr.f32.gmra.mxu0 %v159
    %v236 = vpop.f32.mrf.mxu0
    %v237 = vadd.f32 %v156, %v236
    %v238 = vpop.f32.mrf.mxu0
    %239 = vmatprep.mubr.f32.mxu0 0.0
    %240 = vmatmul.mubr.f32.gmra.mxu0 %v162
    %v241 = vpop.f32.mrf.mxu0
    %v242 = vadd.f32 %v156, %v241
    %v243 = vpop.f32.mrf.mxu0
    %244 = vmatprep.mubr.f32.mxu0 0.0
    %245 = vmatmul.mubr.f32.gmra.mxu0 %v165
    %v246 = vpop.f32.mrf.mxu0
    %v247 = vadd.f32 %v156, %v246
    %v248 = vpop.f32.mrf.mxu0
    %249 = vmatprep.mubr.f32.mxu0 0.0
    %250 = vmatmul.mubr.f32.gmra.mxu0 %v168
    %v251 = vpop.f32.mrf.mxu0
    %v252 = vadd.f32 %v156, %v251
    %v253 = vpop.f32.mrf.mxu0
    %254 = vdwg.mxu0
    %v255 = vld [vmem:[%s2] sm:$0xff]
    %v256 = vld [vmem:[%s2 + $0x8] sm:$0xff]
    %v257 = vld [vmem:[%s2 + $0x10] sm:$0xff]
    %v258 = vld [vmem:[%s2 + $0x18] sm:$0xff]
    %v259 = vld [vmem:[%s5] sm:$0x1]
    %v261 = vlaneseq
    %v262 = vshrl.u32 %v261, 7
    %v263 = vsub.s32 0, %v262
    %v264 = vrot.slane %v259, %v263
    %266 = vmatprep.subr.mxu0 0.0
    %267 = vmatpush1.msra.mxu0 0.0
    %268 = vmatprep.subr.mxu0 0.0
    %269 = vmatpush1.msra.mxu0 0.0
    %270 = vmatprep.subr.mxu0 0.0
    %271 = vmatpush1.msra.mxu0 0.0
    %272 = vmatprep.subr.mxu0 0.0
    %273 = vmatpush1.msra.mxu0 0.0
    %274 = vmatprep.subr.mxu0 0.0
    %275 = vmatpush1.msra.mxu0 0.0
    %276 = vmatprep.subr.mxu0 0.0
    %277 = vmatpush1.msra.mxu0 0.0
    %278 = vmatprep.subr.mxu0 0.0
    %279 = vmatpush1.msra.mxu0 0.0
    %280 = vmatprep.subr.mxu0 0.0
    %281 = vmatpush1.msra.mxu0 0.0
    %282 = vmatprep.subr.mxu0 0.0
    %283 = vmatpush1.msra.mxu0 0.0
    %284 = vmatprep.subr.mxu0 0.0
    %285 = vmatpush1.msra.mxu0 0.0
    %286 = vmatprep.subr.mxu0 0.0
    %287 = vmatpush1.msra.mxu0 0.0
    %288 = vmatprep.subr.mxu0 0.0
    %289 = vmatpush1.msra.mxu0 0.0
    %290 = vmatprep.subr.mxu0 0.0
    %291 = vmatpush1.msra.mxu0 %v258
    %292 = vmatprep.subr.mxu0 0.0
    %293 = vmatpush1.msra.mxu0 %v257
    %294 = vmatprep.subr.mxu0 0.0
    %295 = vmatpush1.msra.mxu0 %v256
    %296 = vmatprep.subr.mxu0 0.0
    %297 = vmatpush1.msra.mxu0 %v255
    %298 = vmatprep.subr.mxu0 0.0
    %299 = vmatpush2.msra.mxu0 0.0
    %300 = vmatprep.subr.mxu0 0.0
    %301 = vmatpush2.msra.mxu0 0.0
    %302 = vmatprep.subr.mxu0 0.0
    %303 = vmatpush2.msra.mxu0 0.0
    %304 = vmatprep.subr.mxu0 0.0
    %305 = vmatpush2.msra.mxu0 0.0
    %306 = vmatprep.subr.mxu0 0.0
    %307 = vmatpush2.msra.mxu0 0.0
    %308 = vmatprep.subr.mxu0 0.0
    %309 = vmatpush2.msra.mxu0 0.0
    %310 = vmatprep.subr.mxu0 0.0
    %311 = vmatpush2.msra.mxu0 0.0
    %312 = vmatprep.subr.mxu0 0.0
    %313 = vmatpush2.msra.mxu0 0.0
    %314 = vmatprep.subr.mxu0 0.0
    %315 = vmatpush2.msra.mxu0 0.0
    %316 = vmatprep.subr.mxu0 0.0
    %317 = vmatpush2.msra.mxu0 0.0
    %318 = vmatprep.subr.mxu0 0.0
    %319 = vmatpush2.msra.mxu0 0.0
    %320 = vmatprep.subr.mxu0 0.0
    %321 = vmatpush2.msra.mxu0 0.0
    %322 = vmatprep.subr.mxu0 0.0
    %323 = vmatpush2.msra.mxu0 0.0
    %324 = vmatprep.subr.mxu0 0.0
    %325 = vmatpush2.msra.mxu0 0.0
    %326 = vmatprep.subr.mxu0 0.0
    %327 = vmatpush2.msra.mxu0 0.0
    %328 = vmatprep.subr.mxu0 0.0
    %329 = vmatpush2.msra.mxu0 0.0
    %330 = vmatprep.mubr.f32.mxu0 0.0
    %331 = vmatmul.mubr.f32.gmra.mxu0 %v159
    %v332 = vpop.f32.mrf.mxu0
    %v333 = vadd.f32 %v264, %v332
    %v334 = vpop.f32.mrf.mxu0
    %335 = vmatprep.mubr.f32.mxu0 0.0
    %336 = vmatmul.mubr.f32.gmra.mxu0 %v162
    %v337 = vpop.f32.mrf.mxu0
    %v338 = vadd.f32 %v264, %v337
    %v339 = vpop.f32.mrf.mxu0
    %340 = vmatprep.mubr.f32.mxu0 0.0
    %341 = vmatmul.mubr.f32.gmra.mxu0 %v165
    %v342 = vpop.f32.mrf.mxu0
    %v343 = vadd.f32 %v264, %v342
    %v344 = vpop.f32.mrf.mxu0
    %345 = vmatprep.mubr.f32.mxu0 0.0
    %346 = vmatmul.mubr.f32.gmra.mxu0 %v168
    %v347 = vpop.f32.mrf.mxu0
    %v348 = vadd.f32 %v264, %v347
    %v349 = vpop.f32.mrf.mxu0
    %350 = vdwg.mxu0
    %v351 = vld [vmem:[#allocation2] sm:$0xff]
    %v352 = vld [vmem:[#allocation2 + $0x8] sm:$0xff]
    %v353 = vld [vmem:[#allocation2 + $0x10] sm:$0xff]
    %v354 = vld [vmem:[#allocation2 + $0x18] sm:$0xff]
    %v355 = vld [vmem:[%s6] sm:$0x1]
    %v357 = vlaneseq
    %v358 = vshrl.u32 %v357, 7
    %v359 = vsub.s32 0, %v358
    %v360 = vrot.slane %v355, %v359
    %362 = vmatprep.subr.mxu0 0.0
    %363 = vmatpush1.msra.mxu0 0.0
    %364 = vmatprep.subr.mxu0 0.0
    %365 = vmatpush1.msra.mxu0 0.0
    %366 = vmatprep.subr.mxu0 0.0
    %367 = vmatpush1.msra.mxu0 0.0
    %368 = vmatprep.subr.mxu0 0.0
    %369 = vmatpush1.msra.mxu0 0.0
    %370 = vmatprep.subr.mxu0 0.0
    %371 = vmatpush1.msra.mxu0 0.0
    %372 = vmatprep.subr.mxu0 0.0
    %373 = vmatpush1.msra.mxu0 0.0
    %374 = vmatprep.subr.mxu0 0.0
    %375 = vmatpush1.msra.mxu0 0.0
    %376 = vmatprep.subr.mxu0 0.0
    %377 = vmatpush1.msra.mxu0 0.0
    %378 = vmatprep.subr.mxu0 0.0
    %379 = vmatpush1.msra.mxu0 0.0
    %380 = vmatprep.subr.mxu0 0.0
    %381 = vmatpush1.msra.mxu0 0.0
    %382 = vmatprep.subr.mxu0 0.0
    %383 = vmatpush1.msra.mxu0 0.0
    %384 = vmatprep.subr.mxu0 0.0
    %385 = vmatpush1.msra.mxu0 0.0
    %386 = vmatprep.subr.mxu0 0.0
    %387 = vmatpush1.msra.mxu0 %v354
    %388 = vmatprep.subr.mxu0 0.0
    %389 = vmatpush1.msra.mxu0 %v353
    %390 = vmatprep.subr.mxu0 0.0
    %391 = vmatpush1.msra.mxu0 %v352
    %392 = vmatprep.subr.mxu0 0.0
    %393 = vmatpush1.msra.mxu0 %v351
    %394 = vmatprep.subr.mxu0 0.0
    %395 = vmatpush2.msra.mxu0 0.0
    %396 = vmatprep.subr.mxu0 0.0
    %397 = vmatpush2.msra.mxu0 0.0
    %398 = vmatprep.subr.mxu0 0.0
    %399 = vmatpush2.msra.mxu0 0.0
    %400 = vmatprep.subr.mxu0 0.0
    %401 = vmatpush2.msra.mxu0 0.0
    %402 = vmatprep.subr.mxu0 0.0
    %403 = vmatpush2.msra.mxu0 0.0
    %404 = vmatprep.subr.mxu0 0.0
    %405 = vmatpush2.msra.mxu0 0.0
    %406 = vmatprep.subr.mxu0 0.0
    %407 = vmatpush2.msra.mxu0 0.0
    %408 = vmatprep.subr.mxu0 0.0
    %409 = vmatpush2.msra.mxu0 0.0
    %410 = vmatprep.subr.mxu0 0.0
    %411 = vmatpush2.msra.mxu0 0.0
    %412 = vmatprep.subr.mxu0 0.0
    %413 = vmatpush2.msra.mxu0 0.0
    %414 = vmatprep.subr.mxu0 0.0
    %415 = vmatpush2.msra.mxu0 0.0
    %416 = vmatprep.subr.mxu0 0.0
    %417 = vmatpush2.msra.mxu0 0.0
    %418 = vmatprep.subr.mxu0 0.0
    %419 = vmatpush2.msra.mxu0 0.0
    %420 = vmatprep.subr.mxu0 0.0
    %421 = vmatpush2.msra.mxu0 0.0
    %422 = vmatprep.subr.mxu0 0.0
    %423 = vmatpush2.msra.mxu0 0.0
    %424 = vmatprep.subr.mxu0 0.0
    %425 = vmatpush2.msra.mxu0 0.0
    %426 = vmatprep.mubr.f32.mxu0 0.0
    %427 = vmatmul.mubr.f32.gmra.mxu0 %v159
    %v428 = vpop.f32.mrf.mxu0
    %v429 = vadd.f32 %v360, %v428
    %v430 = vpop.f32.mrf.mxu0
    %431 = vmatprep.mubr.f32.mxu0 0.0
    %432 = vmatmul.mubr.f32.gmra.mxu0 %v162
    %v433 = vpop.f32.mrf.mxu0
    %v434 = vadd.f32 %v360, %v433
    %v435 = vpop.f32.mrf.mxu0
    %436 = vmatprep.mubr.f32.mxu0 0.0
    %437 = vmatmul.mubr.f32.gmra.mxu0 %v165
    %v438 = vpop.f32.mrf.mxu0
    %v439 = vadd.f32 %v360, %v438
    %v440 = vpop.f32.mrf.mxu0
    %441 = vmatprep.mubr.f32.mxu0 0.0
    %442 = vmatmul.mubr.f32.gmra.mxu0 %v168
    %v443 = vpop.f32.mrf.mxu0
    %v444 = vadd.f32 %v360, %v443
    %v445 = vpop.f32.mrf.mxu0
    %446 = vdwg.mxu0
    %vm447 = vcmask 64512
    %v449 = vsel %vm447, %v237, 0
    %v452 = vsel %vm447, %v242, 0
    %v455 = vsel %vm447, %v247, 0
    %v458 = vsel %vm447, %v252, 0
    %v461 = vsel %vm447, %v333, 0
    %v464 = vsel %vm447, %v338, 0
    %v467 = vsel %vm447, %v343, 0
    %v470 = vsel %vm447, %v348, 0
    %472 = vmatprep.subr.mxu0 0.0
    %473 = vmatpush1.xpose.msra.mxu0 0.0
    %474 = vmatprep.subr.mxu0 0.0
    %475 = vmatpush1.xpose.msra.mxu0 0.0
    %476 = vmatprep.subr.mxu0 0.0
    %477 = vmatpush1.xpose.msra.mxu0 0.0
    %478 = vmatprep.subr.mxu0 0.0
    %479 = vmatpush1.xpose.msra.mxu0 0.0
    %480 = vmatprep.subr.mxu0 0.0
    %481 = vmatpush1.xpose.msra.mxu0 0.0
    %482 = vmatprep.subr.mxu0 0.0
    %483 = vmatpush1.xpose.msra.mxu0 0.0
    %484 = vmatprep.subr.mxu0 0.0
    %485 = vmatpush1.xpose.msra.mxu0 0.0
    %486 = vmatprep.subr.mxu0 0.0
    %487 = vmatpush1.xpose.msra.mxu0 0.0
    %488 = vmatprep.subr.mxu0 0.0
    %489 = vmatpush1.xpose.msra.mxu0 0.0
    %490 = vmatprep.subr.mxu0 0.0
    %491 = vmatpush1.xpose.msra.mxu0 0.0
    %492 = vmatprep.subr.mxu0 0.0
    %493 = vmatpush1.xpose.msra.mxu0 0.0
    %494 = vmatprep.subr.mxu0 0.0
    %495 = vmatpush1.xpose.msra.mxu0 0.0
    %496 = vmatprep.subr.mxu0 0.0
    %497 = vmatpush1.xpose.msra.mxu0 %v470
    %498 = vmatprep.subr.mxu0 0.0
    %499 = vmatpush1.xpose.msra.mxu0 %v467
    %500 = vmatprep.subr.mxu0 0.0
    %501 = vmatpush1.xpose.msra.mxu0 %v464
    %502 = vmatprep.subr.mxu0 0.0
    %503 = vmatpush1.xpose.msra.mxu0 %v461
    %504 = vmatprep.subr.mxu0 0.0
    %505 = vmatpush2.xpose.msra.mxu0 0.0
    %506 = vmatprep.subr.mxu0 0.0
    %507 = vmatpush2.xpose.msra.mxu0 0.0
    %508 = vmatprep.subr.mxu0 0.0
    %509 = vmatpush2.xpose.msra.mxu0 0.0
    %510 = vmatprep.subr.mxu0 0.0
    %511 = vmatpush2.xpose.msra.mxu0 0.0
    %512 = vmatprep.subr.mxu0 0.0
    %513 = vmatpush2.xpose.msra.mxu0 0.0
    %514 = vmatprep.subr.mxu0 0.0
    %515 = vmatpush2.xpose.msra.mxu0 0.0
    %516 = vmatprep.subr.mxu0 0.0
    %517 = vmatpush2.xpose.msra.mxu0 0.0
    %518 = vmatprep.subr.mxu0 0.0
    %519 = vmatpush2.xpose.msra.mxu0 0.0
    %520 = vmatprep.subr.mxu0 0.0
    %521 = vmatpush2.xpose.msra.mxu0 0.0
    %522 = vmatprep.subr.mxu0 0.0
    %523 = vmatpush2.xpose.msra.mxu0 0.0
    %524 = vmatprep.subr.mxu0 0.0
    %525 = vmatpush2.xpose.msra.mxu0 0.0
    %526 = vmatprep.subr.mxu0 0.0
    %527 = vmatpush2.xpose.msra.mxu0 0.0
    %528 = vmatprep.subr.mxu0 0.0
    %529 = vmatpush2.xpose.msra.mxu0 0.0
    %530 = vmatprep.subr.mxu0 0.0
    %531 = vmatpush2.xpose.msra.mxu0 0.0
    %532 = vmatprep.subr.mxu0 0.0
    %533 = vmatpush2.xpose.msra.mxu0 0.0
    %534 = vmatprep.subr.mxu0 0.0
    %535 = vmatpush2.xpose.msra.mxu0 0.0
    %536 = vmatprep.mubr.f32.mxu0 0.0
    %537 = vmatmul.mubr.f32.gmra.mxu0 %v449
    %v538 = vpop.f32.mrf.mxu0
    %v539 = vadd.f32 0.0, %v538
    %v540 = vpop.f32.mrf.mxu0
    %541 = vmatprep.mubr.f32.mxu0 0.0
    %542 = vmatmul.mubr.f32.gmra.mxu0 %v452
    %v543 = vpop.f32.mrf.mxu0
    %v544 = vadd.f32 0.0, %v543
    %v545 = vpop.f32.mrf.mxu0
    %546 = vmatprep.mubr.f32.mxu0 0.0
    %547 = vmatmul.mubr.f32.gmra.mxu0 %v455
    %v548 = vpop.f32.mrf.mxu0
    %v549 = vadd.f32 0.0, %v548
    %v550 = vpop.f32.mrf.mxu0
    %551 = vmatprep.mubr.f32.mxu0 0.0
    %552 = vmatmul.mubr.f32.gmra.mxu0 %v458
    %v553 = vpop.f32.mrf.mxu0
    %v554 = vadd.f32 0.0, %v553
    %v555 = vpop.f32.mrf.mxu0
    %556 = vdwg.mxu0
    %557 = vrot.lane.b32.xlu0 %v237, 120
    %v558 = vpop.permute.xlu0 %557
    %559 = vrot.lane.b32.xlu0 %v242, 120
    %v560 = vpop.permute.xlu0 %559
    %561 = vrot.lane.b32.xlu0 %v247, 120
    %v562 = vpop.permute.xlu0 %561
    %563 = vrot.lane.b32.xlu0 %v252, 120
    %v564 = vpop.permute.xlu0 %563
    %565 = vrot.lane.b32.xlu0 %v333, 120
    %v566 = vpop.permute.xlu0 %565
    %567 = vrot.lane.b32.xlu0 %v338, 120
    %v568 = vpop.permute.xlu0 %567
    %569 = vrot.lane.b32.xlu0 %v343, 120
    %v570 = vpop.permute.xlu0 %569
    %571 = vrot.lane.b32.xlu0 %v348, 120
    %v572 = vpop.permute.xlu0 %571
    %v573 = vsel %vm447, %v558, 0
    %v575 = vsel %vm447, %v560, 0
    %v577 = vsel %vm447, %v562, 0
    %v579 = vsel %vm447, %v564, 0
    %v581 = vsel %vm447, %v566, 0
    %v583 = vsel %vm447, %v568, 0
    %v585 = vsel %vm447, %v570, 0
    %v587 = vsel %vm447, %v572, 0
    %589 = vmatprep.subr.mxu0 0.0
    %590 = vmatpush1.xpose.msra.mxu0 0.0
    %591 = vmatprep.subr.mxu0 0.0
    %592 = vmatpush1.xpose.msra.mxu0 0.0
    %593 = vmatprep.subr.mxu0 0.0
    %594 = vmatpush1.xpose.msra.mxu0 0.0
    %595 = vmatprep.subr.mxu0 0.0
    %596 = vmatpush1.xpose.msra.mxu0 0.0
    %597 = vmatprep.subr.mxu0 0.0
    %598 = vmatpush1.xpose.msra.mxu0 0.0
    %599 = vmatprep.subr.mxu0 0.0
    %600 = vmatpush1.xpose.msra.mxu0 0.0
    %601 = vmatprep.subr.mxu0 0.0
    %602 = vmatpush1.xpose.msra.mxu0 0.0
    %603 = vmatprep.subr.mxu0 0.0
    %604 = vmatpush1.xpose.msra.mxu0 0.0
    %605 = vmatprep.subr.mxu0 0.0
    %606 = vmatpush1.xpose.msra.mxu0 0.0
    %607 = vmatprep.subr.mxu0 0.0
    %608 = vmatpush1.xpose.msra.mxu0 0.0
    %609 = vmatprep.subr.mxu0 0.0
    %610 = vmatpush1.xpose.msra.mxu0 0.0
    %611 = vmatprep.subr.mxu0 0.0
    %612 = vmatpush1.xpose.msra.mxu0 0.0
    %613 = vmatprep.subr.mxu0 0.0
    %614 = vmatpush1.xpose.msra.mxu0 %v587
    %615 = vmatprep.subr.mxu0 0.0
    %616 = vmatpush1.xpose.msra.mxu0 %v585
    %617 = vmatprep.subr.mxu0 0.0
    %618 = vmatpush1.xpose.msra.mxu0 %v583
    %619 = vmatprep.subr.mxu0 0.0
    %620 = vmatpush1.xpose.msra.mxu0 %v581
    %621 = vmatprep.subr.mxu0 0.0
    %622 = vmatpush2.xpose.msra.mxu0 0.0
    %623 = vmatprep.subr.mxu0 0.0
    %624 = vmatpush2.xpose.msra.mxu0 0.0
    %625 = vmatprep.subr.mxu0 0.0
    %626 = vmatpush2.xpose.msra.mxu0 0.0
    %627 = vmatprep.subr.mxu0 0.0
    %628 = vmatpush2.xpose.msra.mxu0 0.0
    %629 = vmatprep.subr.mxu0 0.0
    %630 = vmatpush2.xpose.msra.mxu0 0.0
    %631 = vmatprep.subr.mxu0 0.0
    %632 = vmatpush2.xpose.msra.mxu0 0.0
    %633 = vmatprep.subr.mxu0 0.0
    %634 = vmatpush2.xpose.msra.mxu0 0.0
    %635 = vmatprep.subr.mxu0 0.0
    %636 = vmatpush2.xpose.msra.mxu0 0.0
    %637 = vmatprep.subr.mxu0 0.0
    %638 = vmatpush2.xpose.msra.mxu0 0.0
    %639 = vmatprep.subr.mxu0 0.0
    %640 = vmatpush2.xpose.msra.mxu0 0.0
    %641 = vmatprep.subr.mxu0 0.0
    %642 = vmatpush2.xpose.msra.mxu0 0.0
    %643 = vmatprep.subr.mxu0 0.0
    %644 = vmatpush2.xpose.msra.mxu0 0.0
    %645 = vmatprep.subr.mxu0 0.0
    %646 = vmatpush2.xpose.msra.mxu0 0.0
    %647 = vmatprep.subr.mxu0 0.0
    %648 = vmatpush2.xpose.msra.mxu0 0.0
    %649 = vmatprep.subr.mxu0 0.0
    %650 = vmatpush2.xpose.msra.mxu0 0.0
    %651 = vmatprep.subr.mxu0 0.0
    %652 = vmatpush2.xpose.msra.mxu0 0.0
    %653 = vmatprep.mubr.f32.mxu0 0.0
    %654 = vmatmul.mubr.f32.gmra.mxu0 %v573
    %v655 = vpop.f32.mrf.mxu0
    %v656 = vadd.f32 0.0, %v655
    %v657 = vpop.f32.mrf.mxu0
    %658 = vmatprep.mubr.f32.mxu0 0.0
    %659 = vmatmul.mubr.f32.gmra.mxu0 %v575
    %v660 = vpop.f32.mrf.mxu0
    %v661 = vadd.f32 0.0, %v660
    %v662 = vpop.f32.mrf.mxu0
    %663 = vmatprep.mubr.f32.mxu0 0.0
    %664 = vmatmul.mubr.f32.gmra.mxu0 %v577
    %v665 = vpop.f32.mrf.mxu0
    %v666 = vadd.f32 0.0, %v665
    %v667 = vpop.f32.mrf.mxu0
    %668 = vmatprep.mubr.f32.mxu0 0.0
    %669 = vmatmul.mubr.f32.gmra.mxu0 %v579
    %v670 = vpop.f32.mrf.mxu0
    %v671 = vadd.f32 0.0, %v670
    %v672 = vpop.f32.mrf.mxu0
    %673 = vdwg.mxu0
    %674 = vrot.lane.b32.xlu0 %v237, 112
    %v675 = vpop.permute.xlu0 %674
    %676 = vrot.lane.b32.xlu0 %v242, 112
    %v677 = vpop.permute.xlu0 %676
    %678 = vrot.lane.b32.xlu0 %v247, 112
    %v679 = vpop.permute.xlu0 %678
    %680 = vrot.lane.b32.xlu0 %v252, 112
    %v681 = vpop.permute.xlu0 %680
    %682 = vrot.lane.b32.xlu0 %v333, 112
    %v683 = vpop.permute.xlu0 %682
    %684 = vrot.lane.b32.xlu0 %v338, 112
    %v685 = vpop.permute.xlu0 %684
    %686 = vrot.lane.b32.xlu0 %v343, 112
    %v687 = vpop.permute.xlu0 %686
    %688 = vrot.lane.b32.xlu0 %v348, 112
    %v689 = vpop.permute.xlu0 %688
    %v690 = vsel %vm447, %v675, 0
    %v692 = vsel %vm447, %v677, 0
    %v694 = vsel %vm447, %v679, 0
    %v696 = vsel %vm447, %v681, 0
    %v698 = vsel %vm447, %v683, 0
    %v700 = vsel %vm447, %v685, 0
    %v702 = vsel %vm447, %v687, 0
    %v704 = vsel %vm447, %v689, 0
    %706 = vmatprep.subr.mxu0 0.0
    %707 = vmatpush1.xpose.msra.mxu0 0.0
    %708 = vmatprep.subr.mxu0 0.0
    %709 = vmatpush1.xpose.msra.mxu0 0.0
    %710 = vmatprep.subr.mxu0 0.0
    %711 = vmatpush1.xpose.msra.mxu0 0.0
    %712 = vmatprep.subr.mxu0 0.0
    %713 = vmatpush1.xpose.msra.mxu0 0.0
    %714 = vmatprep.subr.mxu0 0.0
    %715 = vmatpush1.xpose.msra.mxu0 0.0
    %716 = vmatprep.subr.mxu0 0.0
    %717 = vmatpush1.xpose.msra.mxu0 0.0
    %718 = vmatprep.subr.mxu0 0.0
    %719 = vmatpush1.xpose.msra.mxu0 0.0
    %720 = vmatprep.subr.mxu0 0.0
    %721 = vmatpush1.xpose.msra.mxu0 0.0
    %722 = vmatprep.subr.mxu0 0.0
    %723 = vmatpush1.xpose.msra.mxu0 0.0
    %724 = vmatprep.subr.mxu0 0.0
    %725 = vmatpush1.xpose.msra.mxu0 0.0
    %726 = vmatprep.subr.mxu0 0.0
    %727 = vmatpush1.xpose.msra.mxu0 0.0
    %728 = vmatprep.subr.mxu0 0.0
    %729 = vmatpush1.xpose.msra.mxu0 0.0
    %730 = vmatprep.subr.mxu0 0.0
    %731 = vmatpush1.xpose.msra.mxu0 %v704
    %732 = vmatprep.subr.mxu0 0.0
    %733 = vmatpush1.xpose.msra.mxu0 %v702
    %734 = vmatprep.subr.mxu0 0.0
    %735 = vmatpush1.xpose.msra.mxu0 %v700
    %736 = vmatprep.subr.mxu0 0.0
    %737 = vmatpush1.xpose.msra.mxu0 %v698
    %738 = vmatprep.subr.mxu0 0.0
    %739 = vmatpush2.xpose.msra.mxu0 0.0
    %740 = vmatprep.subr.mxu0 0.0
    %741 = vmatpush2.xpose.msra.mxu0 0.0
    %742 = vmatprep.subr.mxu0 0.0
    %743 = vmatpush2.xpose.msra.mxu0 0.0
    %744 = vmatprep.subr.mxu0 0.0
    %745 = vmatpush2.xpose.msra.mxu0 0.0
    %746 = vmatprep.subr.mxu0 0.0
    %747 = vmatpush2.xpose.msra.mxu0 0.0
    %748 = vmatprep.subr.mxu0 0.0
    %749 = vmatpush2.xpose.msra.mxu0 0.0
    %750 = vmatprep.subr.mxu0 0.0
    %751 = vmatpush2.xpose.msra.mxu0 0.0
    %752 = vmatprep.subr.mxu0 0.0
    %753 = vmatpush2.xpose.msra.mxu0 0.0
    %754 = vmatprep.subr.mxu0 0.0
    %755 = vmatpush2.xpose.msra.mxu0 0.0
    %756 = vmatprep.subr.mxu0 0.0
    %757 = vmatpush2.xpose.msra.mxu0 0.0
    %758 = vmatprep.subr.mxu0 0.0
    %759 = vmatpush2.xpose.msra.mxu0 0.0
    %760 = vmatprep.subr.mxu0 0.0
    %761 = vmatpush2.xpose.msra.mxu0 0.0
    %762 = vmatprep.subr.mxu0 0.0
    %763 = vmatpush2.xpose.msra.mxu0 0.0
    %764 = vmatprep.subr.mxu0 0.0
    %765 = vmatpush2.xpose.msra.mxu0 0.0
    %766 = vmatprep.subr.mxu0 0.0
    %767 = vmatpush2.xpose.msra.mxu0 0.0
    %768 = vmatprep.subr.mxu0 0.0
    %769 = vmatpush2.xpose.msra.mxu0 0.0
    %770 = vmatprep.mubr.f32.mxu0 0.0
    %771 = vmatmul.mubr.f32.gmra.mxu0 %v690
    %v772 = vpop.f32.mrf.mxu0
    %v773 = vadd.f32 0.0, %v772
    %v774 = vpop.f32.mrf.mxu0
    %775 = vmatprep.mubr.f32.mxu0 0.0
    %776 = vmatmul.mubr.f32.gmra.mxu0 %v692
    %v777 = vpop.f32.mrf.mxu0
    %v778 = vadd.f32 0.0, %v777
    %v779 = vpop.f32.mrf.mxu0
    %780 = vmatprep.mubr.f32.mxu0 0.0
    %781 = vmatmul.mubr.f32.gmra.mxu0 %v694
    %v782 = vpop.f32.mrf.mxu0
    %v783 = vadd.f32 0.0, %v782
    %v784 = vpop.f32.mrf.mxu0
    %785 = vmatprep.mubr.f32.mxu0 0.0
    %786 = vmatmul.mubr.f32.gmra.mxu0 %v696
    %v787 = vpop.f32.mrf.mxu0
    %v788 = vadd.f32 0.0, %v787
    %v789 = vpop.f32.mrf.mxu0
    %790 = vdwg.mxu0
    %791 = vrot.lane.b32.xlu0 %v237, 104
    %v792 = vpop.permute.xlu0 %791
    %793 = vrot.lane.b32.xlu0 %v242, 104
    %v794 = vpop.permute.xlu0 %793
    %795 = vrot.lane.b32.xlu0 %v247, 104
    %v796 = vpop.permute.xlu0 %795
    %797 = vrot.lane.b32.xlu0 %v252, 104
    %v798 = vpop.permute.xlu0 %797
    %799 = vrot.lane.b32.xlu0 %v333, 104
    %v800 = vpop.permute.xlu0 %799
    %801 = vrot.lane.b32.xlu0 %v338, 104
    %v802 = vpop.permute.xlu0 %801
    %803 = vrot.lane.b32.xlu0 %v343, 104
    %v804 = vpop.permute.xlu0 %803
    %805 = vrot.lane.b32.xlu0 %v348, 104
    %v806 = vpop.permute.xlu0 %805
    %v807 = vsel %vm447, %v792, 0
    %v809 = vsel %vm447, %v794, 0
    %v811 = vsel %vm447, %v796, 0
    %v813 = vsel %vm447, %v798, 0
    %v815 = vsel %vm447, %v800, 0
    %v817 = vsel %vm447, %v802, 0
    %v819 = vsel %vm447, %v804, 0
    %v821 = vsel %vm447, %v806, 0
    %823 = vmatprep.subr.mxu0 0.0
    %824 = vmatpush1.xpose.msra.mxu0 0.0
    %825 = vmatprep.subr.mxu0 0.0
    %826 = vmatpush1.xpose.msra.mxu0 0.0
    %827 = vmatprep.subr.mxu0 0.0
    %828 = vmatpush1.xpose.msra.mxu0 0.0
    %829 = vmatprep.subr.mxu0 0.0
    %830 = vmatpush1.xpose.msra.mxu0 0.0
    %831 = vmatprep.subr.mxu0 0.0
    %832 = vmatpush1.xpose.msra.mxu0 0.0
    %833 = vmatprep.subr.mxu0 0.0
    %834 = vmatpush1.xpose.msra.mxu0 0.0
    %835 = vmatprep.subr.mxu0 0.0
    %836 = vmatpush1.xpose.msra.mxu0 0.0
    %837 = vmatprep.subr.mxu0 0.0
    %838 = vmatpush1.xpose.msra.mxu0 0.0
    %839 = vmatprep.subr.mxu0 0.0
    %840 = vmatpush1.xpose.msra.mxu0 0.0
    %841 = vmatprep.subr.mxu0 0.0
    %842 = vmatpush1.xpose.msra.mxu0 0.0
    %843 = vmatprep.subr.mxu0 0.0
    %844 = vmatpush1.xpose.msra.mxu0 0.0
    %845 = vmatprep.subr.mxu0 0.0
    %846 = vmatpush1.xpose.msra.mxu0 0.0
    %847 = vmatprep.subr.mxu0 0.0
    %848 = vmatpush1.xpose.msra.mxu0 %v821
    %849 = vmatprep.subr.mxu0 0.0
    %850 = vmatpush1.xpose.msra.mxu0 %v819
    %851 = vmatprep.subr.mxu0 0.0
    %852 = vmatpush1.xpose.msra.mxu0 %v817
    %853 = vmatprep.subr.mxu0 0.0
    %854 = vmatpush1.xpose.msra.mxu0 %v815
    %855 = vmatprep.subr.mxu0 0.0
    %856 = vmatpush2.xpose.msra.mxu0 0.0
    %857 = vmatprep.subr.mxu0 0.0
    %858 = vmatpush2.xpose.msra.mxu0 0.0
    %859 = vmatprep.subr.mxu0 0.0
    %860 = vmatpush2.xpose.msra.mxu0 0.0
    %861 = vmatprep.subr.mxu0 0.0
    %862 = vmatpush2.xpose.msra.mxu0 0.0
    %863 = vmatprep.subr.mxu0 0.0
    %864 = vmatpush2.xpose.msra.mxu0 0.0
    %865 = vmatprep.subr.mxu0 0.0
    %866 = vmatpush2.xpose.msra.mxu0 0.0
    %867 = vmatprep.subr.mxu0 0.0
    %868 = vmatpush2.xpose.msra.mxu0 0.0
    %869 = vmatprep.subr.mxu0 0.0
    %870 = vmatpush2.xpose.msra.mxu0 0.0
    %871 = vmatprep.subr.mxu0 0.0
    %872 = vmatpush2.xpose.msra.mxu0 0.0
    %873 = vmatprep.subr.mxu0 0.0
    %874 = vmatpush2.xpose.msra.mxu0 0.0
    %875 = vmatprep.subr.mxu0 0.0
    %876 = vmatpush2.xpose.msra.mxu0 0.0
    %877 = vmatprep.subr.mxu0 0.0
    %878 = vmatpush2.xpose.msra.mxu0 0.0
    %879 = vmatprep.subr.mxu0 0.0
    %880 = vmatpush2.xpose.msra.mxu0 0.0
    %881 = vmatprep.subr.mxu0 0.0
    %882 = vmatpush2.xpose.msra.mxu0 0.0
    %883 = vmatprep.subr.mxu0 0.0
    %884 = vmatpush2.xpose.msra.mxu0 0.0
    %885 = vmatprep.subr.mxu0 0.0
    %886 = vmatpush2.xpose.msra.mxu0 0.0
    %887 = vmatprep.mubr.f32.mxu0 0.0
    %888 = vmatmul.mubr.f32.gmra.mxu0 %v807
    %v889 = vpop.f32.mrf.mxu0
    %v890 = vadd.f32 0.0, %v889
    %v891 = vpop.f32.mrf.mxu0
    %892 = vmatprep.mubr.f32.mxu0 0.0
    %893 = vmatmul.mubr.f32.gmra.mxu0 %v809
    %v894 = vpop.f32.mrf.mxu0
    %v895 = vadd.f32 0.0, %v894
    %v896 = vpop.f32.mrf.mxu0
    %897 = vmatprep.mubr.f32.mxu0 0.0
    %898 = vmatmul.mubr.f32.gmra.mxu0 %v811
    %v899 = vpop.f32.mrf.mxu0
    %v900 = vadd.f32 0.0, %v899
    %v901 = vpop.f32.mrf.mxu0
    %902 = vmatprep.mubr.f32.mxu0 0.0
    %903 = vmatmul.mubr.f32.gmra.mxu0 %v813
    %v904 = vpop.f32.mrf.mxu0
    %v905 = vadd.f32 0.0, %v904
    %v906 = vpop.f32.mrf.mxu0
    %907 = vdwg.mxu0
    %v908 = vld [vmem:[#allocation7] sm:$0xff]
    %v909 = vld [vmem:[#allocation7 + $0x8] sm:$0xff]
    %v910 = vld [vmem:[#allocation7 + $0x10] sm:$0xff]
    %v911 = vld [vmem:[#allocation7 + $0x18] sm:$0xff]
    %v912 = vld [vmem:[#allocation7 + $0x20] sm:$0xff]
    %v913 = vld [vmem:[#allocation7 + $0x28] sm:$0xff]
    %v914 = vld [vmem:[#allocation7 + $0x30] sm:$0xff]
    %v915 = vld [vmem:[#allocation7 + $0x38] sm:$0xff]
    %v916 = vld [vmem:[#allocation7 + $0x40] sm:$0xff]
    %v917 = vld [vmem:[#allocation7 + $0x48] sm:$0xff]
    %v918 = vld [vmem:[#allocation7 + $0x50] sm:$0xff]
    %v919 = vld [vmem:[#allocation7 + $0x58] sm:$0xff]
    %v920 = vld [vmem:[#allocation7 + $0x60] sm:$0xff]
    %v921 = vld [vmem:[#allocation7 + $0x68] sm:$0xff]
    %v922 = vld [vmem:[#allocation7 + $0x70] sm:$0xff]
    %v923 = vld [vmem:[#allocation7 + $0x78] sm:$0xff]
    %v924 = vadd.f32 %v539, %v908
    %v925 = vadd.f32 %v544, %v909
    %v926 = vadd.f32 %v549, %v910
    %v927 = vadd.f32 %v554, %v911
    %v928 = vadd.f32 %v656, %v912
    %v929 = vadd.f32 %v661, %v913
    %v930 = vadd.f32 %v666, %v914
    %v931 = vadd.f32 %v671, %v915
    %v932 = vadd.f32 %v773, %v916
    %v933 = vadd.f32 %v778, %v917
    %v934 = vadd.f32 %v783, %v918
    %v935 = vadd.f32 %v788, %v919
    %v936 = vadd.f32 %v890, %v920
    %v937 = vadd.f32 %v895, %v921
    %v938 = vadd.f32 %v900, %v922
    %v939 = vadd.f32 %v905, %v923
    %v940 = vsel %vm121, %v924, -inf
    %941 = vmax.xlane.f32.xlu0 %v940
    %v942 = vpop.xlane.xlu0 %941
    %v943 = vsel %vm121, %v925, -inf
    %944 = vmax.xlane.f32.xlu0 %v943
    %v945 = vpop.xlane.xlu0 %944
    %v946 = vsel %vm121, %v926, -inf
    %947 = vmax.xlane.f32.xlu0 %v946
    %v948 = vpop.xlane.xlu0 %947
    %v949 = vsel %vm121, %v927, -inf
    %950 = vmax.xlane.f32.xlu0 %v949
    %v951 = vpop.xlane.xlu0 %950
    %v952 = vsel %vm121, %v928, -inf
    %953 = vmax.xlane.f32.xlu0 %v952
    %v954 = vpop.xlane.xlu0 %953
    %v955 = vsel %vm121, %v929, -inf
    %956 = vmax.xlane.f32.xlu0 %v955
    %v957 = vpop.xlane.xlu0 %956
    %v958 = vsel %vm121, %v930, -inf
    %959 = vmax.xlane.f32.xlu0 %v958
    %v960 = vpop.xlane.xlu0 %959
    %v961 = vsel %vm121, %v931, -inf
    %962 = vmax.xlane.f32.xlu0 %v961
    %v963 = vpop.xlane.xlu0 %962
    %v964 = vsel %vm121, %v932, -inf
    %965 = vmax.xlane.f32.xlu0 %v964
    %v966 = vpop.xlane.xlu0 %965
    %v967 = vsel %vm121, %v933, -inf
    %968 = vmax.xlane.f32.xlu0 %v967
    %v969 = vpop.xlane.xlu0 %968
    %v970 = vsel %vm121, %v934, -inf
    %971 = vmax.xlane.f32.xlu0 %v970
    %v972 = vpop.xlane.xlu0 %971
    %v973 = vsel %vm121, %v935, -inf
    %974 = vmax.xlane.f32.xlu0 %v973
    %v975 = vpop.xlane.xlu0 %974
    %v976 = vsel %vm121, %v936, -inf
    %977 = vmax.xlane.f32.xlu0 %v976
    %v978 = vpop.xlane.xlu0 %977
    %v979 = vsel %vm121, %v937, -inf
    %980 = vmax.xlane.f32.xlu0 %v979
    %v981 = vpop.xlane.xlu0 %980
    %v982 = vsel %vm121, %v938, -inf
    %983 = vmax.xlane.f32.xlu0 %v982
    %v984 = vpop.xlane.xlu0 %983
    %v985 = vsel %vm121, %v939, -inf
    %986 = vmax.xlane.f32.xlu0 %v985
    %v987 = vpop.xlane.xlu0 %986
    %v988 = vsub.f32 %v924, %v942
    %v989 = vsub.f32 %v925, %v945
    %v990 = vsub.f32 %v926, %v948
    %v991 = vsub.f32 %v927, %v951
    %v992 = vsub.f32 %v928, %v954
    %v993 = vsub.f32 %v929, %v957
    %v994 = vsub.f32 %v930, %v960
    %v995 = vsub.f32 %v931, %v963
    %v996 = vsub.f32 %v932, %v966
    %v997 = vsub.f32 %v933, %v969
    %v998 = vsub.f32 %v934, %v972
    %v999 = vsub.f32 %v935, %v975
    %v1000 = vsub.f32 %v936, %v978
    %v1001 = vsub.f32 %v937, %v981
    %v1002 = vsub.f32 %v938, %v984
    %v1003 = vsub.f32 %v939, %v987
    %v1004 = vmul.f32 %v988, 1.442695
    %v1005 = vpow.pop %v1004
    %v1006 = vmul.f32 %v989, 1.442695
    %v1007 = vpow.pop %v1006
    %v1008 = vmul.f32 %v990, 1.442695
    %v1009 = vpow.pop %v1008
    %v1010 = vmul.f32 %v991, 1.442695
    %v1011 = vpow.pop %v1010
    %v1012 = vmul.f32 %v992, 1.442695
    %v1013 = vpow.pop %v1012
    %v1014 = vmul.f32 %v993, 1.442695
    %v1015 = vpow.pop %v1014
    %v1016 = vmul.f32 %v994, 1.442695
    %v1017 = vpow.pop %v1016
    %v1018 = vmul.f32 %v995, 1.442695
    %v1019 = vpow.pop %v1018
    %v1020 = vmul.f32 %v996, 1.442695
    %v1021 = vpow.pop %v1020
    %v1022 = vmul.f32 %v997, 1.442695
    %v1023 = vpow.pop %v1022
    %v1024 = vmul.f32 %v998, 1.442695
    %v1025 = vpow.pop %v1024
    %v1026 = vmul.f32 %v999, 1.442695
    %v1027 = vpow.pop %v1026
    %v1028 = vmul.f32 %v1000, 1.442695
    %v1029 = vpow.pop %v1028
    %v1030 = vmul.f32 %v1001, 1.442695
    %v1031 = vpow.pop %v1030
    %v1032 = vmul.f32 %v1002, 1.442695
    %v1033 = vpow.pop %v1032
    %v1034 = vmul.f32 %v1003, 1.442695
    %v1035 = vpow.pop %v1034
    %v1036 = vsel %vm121, %v1005, 0.0
    %1037 = vadd.xlane.f32.xlu0 %v1036
    %v1038 = vpop.xlane.xlu0 %1037
    %v1039 = vsel %vm121, %v1007, 0.0
    %1040 = vadd.xlane.f32.xlu0 %v1039
    %v1041 = vpop.xlane.xlu0 %1040
    %v1042 = vsel %vm121, %v1009, 0.0
    %1043 = vadd.xlane.f32.xlu0 %v1042
    %v1044 = vpop.xlane.xlu0 %1043
    %v1045 = vsel %vm121, %v1011, 0.0
    %1046 = vadd.xlane.f32.xlu0 %v1045
    %v1047 = vpop.xlane.xlu0 %1046
    %v1048 = vsel %vm121, %v1013, 0.0
    %1049 = vadd.xlane.f32.xlu0 %v1048
    %v1050 = vpop.xlane.xlu0 %1049
    %v1051 = vsel %vm121, %v1015, 0.0
    %1052 = vadd.xlane.f32.xlu0 %v1051
    %v1053 = vpop.xlane.xlu0 %1052
    %v1054 = vsel %vm121, %v1017, 0.0
    %1055 = vadd.xlane.f32.xlu0 %v1054
    %v1056 = vpop.xlane.xlu0 %1055
    %v1057 = vsel %vm121, %v1019, 0.0
    %1058 = vadd.xlane.f32.xlu0 %v1057
    %v1059 = vpop.xlane.xlu0 %1058
    %v1060 = vsel %vm121, %v1021, 0.0
    %1061 = vadd.xlane.f32.xlu0 %v1060
    %v1062 = vpop.xlane.xlu0 %1061
    %v1063 = vsel %vm121, %v1023, 0.0
    %1064 = vadd.xlane.f32.xlu0 %v1063
    %v1065 = vpop.xlane.xlu0 %1064
    %v1066 = vsel %vm121, %v1025, 0.0
    %1067 = vadd.xlane.f32.xlu0 %v1066
    %v1068 = vpop.xlane.xlu0 %1067
    %v1069 = vsel %vm121, %v1027, 0.0
    %1070 = vadd.xlane.f32.xlu0 %v1069
    %v1071 = vpop.xlane.xlu0 %1070
    %v1072 = vsel %vm121, %v1029, 0.0
    %1073 = vadd.xlane.f32.xlu0 %v1072
    %v1074 = vpop.xlane.xlu0 %1073
    %v1075 = vsel %vm121, %v1031, 0.0
    %1076 = vadd.xlane.f32.xlu0 %v1075
    %v1077 = vpop.xlane.xlu0 %1076
    %v1078 = vsel %vm121, %v1033, 0.0
    %1079 = vadd.xlane.f32.xlu0 %v1078
    %v1080 = vpop.xlane.xlu0 %1079
    %v1081 = vsel %vm121, %v1035, 0.0
    %1082 = vadd.xlane.f32.xlu0 %v1081
    %v1083 = vpop.xlane.xlu0 %1082
    %v1084 = vrcp.pop %v1038
    %v1085 = vrcp.pop %v1041
    %v1086 = vrcp.pop %v1044
    %v1087 = vrcp.pop %v1047
    %v1088 = vrcp.pop %v1050
    %v1089 = vrcp.pop %v1053
    %v1090 = vrcp.pop %v1056
    %v1091 = vrcp.pop %v1059
    %v1092 = vrcp.pop %v1062
    %v1093 = vrcp.pop %v1065
    %v1094 = vrcp.pop %v1068
    %v1095 = vrcp.pop %v1071
    %v1096 = vrcp.pop %v1074
    %v1097 = vrcp.pop %v1077
    %v1098 = vrcp.pop %v1080
    %v1099 = vrcp.pop %v1083
    %v1100 = vmul.f32 %v1005, %v1084
    %v1101 = vmul.f32 %v1007, %v1085
    %v1102 = vmul.f32 %v1009, %v1086
    %v1103 = vmul.f32 %v1011, %v1087
    %v1104 = vmul.f32 %v1013, %v1088
    %v1105 = vmul.f32 %v1015, %v1089
    %v1106 = vmul.f32 %v1017, %v1090
    %v1107 = vmul.f32 %v1019, %v1091
    %v1108 = vmul.f32 %v1021, %v1092
    %v1109 = vmul.f32 %v1023, %v1093
    %v1110 = vmul.f32 %v1025, %v1094
    %v1111 = vmul.f32 %v1027, %v1095
    %v1112 = vmul.f32 %v1029, %v1096
    %v1113 = vmul.f32 %v1031, %v1097
    %v1114 = vmul.f32 %v1033, %v1098
    %v1115 = vmul.f32 %v1035, %v1099
    %v1117 = vsel %vm121, %v1100, 0
    %v1120 = vsel %vm121, %v1101, 0
    %v1123 = vsel %vm121, %v1102, 0
    %v1126 = vsel %vm121, %v1103, 0
    %1128 = vmatprep.subr.mxu0 0.0
    %1129 = vmatpush1.msra.mxu0 0.0
    %1130 = vmatprep.subr.mxu0 0.0
    %1131 = vmatpush1.msra.mxu0 0.0
    %1132 = vmatprep.subr.mxu0 0.0
    %1133 = vmatpush1.msra.mxu0 0.0
    %1134 = vmatprep.subr.mxu0 0.0
    %1135 = vmatpush1.msra.mxu0 0.0
    %1136 = vmatprep.subr.mxu0 0.0
    %1137 = vmatpush1.msra.mxu0 0.0
    %1138 = vmatprep.subr.mxu0 0.0
    %1139 = vmatpush1.msra.mxu0 0.0
    %1140 = vmatprep.subr.mxu0 0.0
    %1141 = vmatpush1.msra.mxu0 0.0
    %1142 = vmatprep.subr.mxu0 0.0
    %1143 = vmatpush1.msra.mxu0 0.0
    %1144 = vmatprep.subr.mxu0 0.0
    %1145 = vmatpush1.msra.mxu0 0.0
    %1146 = vmatprep.subr.mxu0 0.0
    %1147 = vmatpush1.msra.mxu0 0.0
    %1148 = vmatprep.subr.mxu0 0.0
    %1149 = vmatpush1.msra.mxu0 0.0
    %1150 = vmatprep.subr.mxu0 0.0
    %1151 = vmatpush1.msra.mxu0 0.0
    %1152 = vmatprep.subr.mxu0 0.0
    %1153 = vmatpush1.msra.mxu0 %v444
    %1154 = vmatprep.subr.mxu0 0.0
    %1155 = vmatpush1.msra.mxu0 %v439
    %1156 = vmatprep.subr.mxu0 0.0
    %1157 = vmatpush1.msra.mxu0 %v434
    %1158 = vmatprep.subr.mxu0 0.0
    %1159 = vmatpush1.msra.mxu0 %v429
    %1160 = vmatprep.subr.mxu0 0.0
    %1161 = vmatpush2.msra.mxu0 0.0
    %1162 = vmatprep.subr.mxu0 0.0
    %1163 = vmatpush2.msra.mxu0 0.0
    %1164 = vmatprep.subr.mxu0 0.0
    %1165 = vmatpush2.msra.mxu0 0.0
    %1166 = vmatprep.subr.mxu0 0.0
    %1167 = vmatpush2.msra.mxu0 0.0
    %1168 = vmatprep.subr.mxu0 0.0
    %1169 = vmatpush2.msra.mxu0 0.0
    %1170 = vmatprep.subr.mxu0 0.0
    %1171 = vmatpush2.msra.mxu0 0.0
    %1172 = vmatprep.subr.mxu0 0.0
    %1173 = vmatpush2.msra.mxu0 0.0
    %1174 = vmatprep.subr.mxu0 0.0
    %1175 = vmatpush2.msra.mxu0 0.0
    %1176 = vmatprep.subr.mxu0 0.0
    %1177 = vmatpush2.msra.mxu0 0.0
    %1178 = vmatprep.subr.mxu0 0.0
    %1179 = vmatpush2.msra.mxu0 0.0
    %1180 = vmatprep.subr.mxu0 0.0
    %1181 = vmatpush2.msra.mxu0 0.0
    %1182 = vmatprep.subr.mxu0 0.0
    %1183 = vmatpush2.msra.mxu0 0.0
    %1184 = vmatprep.subr.mxu0 0.0
    %1185 = vmatpush2.msra.mxu0 0.0
    %1186 = vmatprep.subr.mxu0 0.0
    %1187 = vmatpush2.msra.mxu0 0.0
    %1188 = vmatprep.subr.mxu0 0.0
    %1189 = vmatpush2.msra.mxu0 0.0
    %1190 = vmatprep.subr.mxu0 0.0
    %1191 = vmatpush2.msra.mxu0 0.0
    %1192 = vmatprep.mubr.f32.mxu0 0.0
    %1193 = vmatmul.mubr.f32.gmra.mxu0 %v1117
    %v1194 = vpop.f32.mrf.mxu0
    %v1195 = vadd.f32 0.0, %v1194
    %v1196 = vpop.f32.mrf.mxu0
    %1197 = vmatprep.mubr.f32.mxu0 0.0
    %1198 = vmatmul.mubr.f32.gmra.mxu0 %v1120
    %v1199 = vpop.f32.mrf.mxu0
    %v1200 = vadd.f32 0.0, %v1199
    %v1201 = vpop.f32.mrf.mxu0
    %1202 = vmatprep.mubr.f32.mxu0 0.0
    %1203 = vmatmul.mubr.f32.gmra.mxu0 %v1123
    %v1204 = vpop.f32.mrf.mxu0
    %v1205 = vadd.f32 0.0, %v1204
    %v1206 = vpop.f32.mrf.mxu0
    %1207 = vmatprep.mubr.f32.mxu0 0.0
    %1208 = vmatmul.mubr.f32.gmra.mxu0 %v1126
    %v1209 = vpop.f32.mrf.mxu0
    %v1210 = vadd.f32 0.0, %v1209
    %v1211 = vpop.f32.mrf.mxu0
    %1212 = vdwg.mxu0
    %1217 = vrot.lane.b32.xlu0 %v429, 120
    %v1218 = vpop.permute.xlu0 %1217
    %1219 = vrot.lane.b32.xlu0 %v434, 120
    %v1220 = vpop.permute.xlu0 %1219
    %1221 = vrot.lane.b32.xlu0 %v439, 120
    %v1222 = vpop.permute.xlu0 %1221
    %1223 = vrot.lane.b32.xlu0 %v444, 120
    %v1224 = vpop.permute.xlu0 %1223
    %v1230 = vsel %vm121, %v1104, 0
    %v1233 = vsel %vm121, %v1105, 0
    %v1236 = vsel %vm121, %v1106, 0
    %v1239 = vsel %vm121, %v1107, 0
    %1241 = vmatprep.subr.mxu0 0.0
    %1242 = vmatpush1.msra.mxu0 0.0
    %1243 = vmatprep.subr.mxu0 0.0
    %1244 = vmatpush1.msra.mxu0 0.0
    %1245 = vmatprep.subr.mxu0 0.0
    %1246 = vmatpush1.msra.mxu0 0.0
    %1247 = vmatprep.subr.mxu0 0.0
    %1248 = vmatpush1.msra.mxu0 0.0
    %1249 = vmatprep.subr.mxu0 0.0
    %1250 = vmatpush1.msra.mxu0 0.0
    %1251 = vmatprep.subr.mxu0 0.0
    %1252 = vmatpush1.msra.mxu0 0.0
    %1253 = vmatprep.subr.mxu0 0.0
    %1254 = vmatpush1.msra.mxu0 0.0
    %1255 = vmatprep.subr.mxu0 0.0
    %1256 = vmatpush1.msra.mxu0 0.0
    %1257 = vmatprep.subr.mxu0 0.0
    %1258 = vmatpush1.msra.mxu0 0.0
    %1259 = vmatprep.subr.mxu0 0.0
    %1260 = vmatpush1.msra.mxu0 0.0
    %1261 = vmatprep.subr.mxu0 0.0
    %1262 = vmatpush1.msra.mxu0 0.0
    %1263 = vmatprep.subr.mxu0 0.0
    %1264 = vmatpush1.msra.mxu0 0.0
    %1265 = vmatprep.subr.mxu0 0.0
    %1266 = vmatpush1.msra.mxu0 %v1224
    %1267 = vmatprep.subr.mxu0 0.0
    %1268 = vmatpush1.msra.mxu0 %v1222
    %1269 = vmatprep.subr.mxu0 0.0
    %1270 = vmatpush1.msra.mxu0 %v1220
    %1271 = vmatprep.subr.mxu0 0.0
    %1272 = vmatpush1.msra.mxu0 %v1218
    %1273 = vmatprep.subr.mxu0 0.0
    %1274 = vmatpush2.msra.mxu0 0.0
    %1275 = vmatprep.subr.mxu0 0.0
    %1276 = vmatpush2.msra.mxu0 0.0
    %1277 = vmatprep.subr.mxu0 0.0
    %1278 = vmatpush2.msra.mxu0 0.0
    %1279 = vmatprep.subr.mxu0 0.0
    %1280 = vmatpush2.msra.mxu0 0.0
    %1281 = vmatprep.subr.mxu0 0.0
    %1282 = vmatpush2.msra.mxu0 0.0
    %1283 = vmatprep.subr.mxu0 0.0
    %1284 = vmatpush2.msra.mxu0 0.0
    %1285 = vmatprep.subr.mxu0 0.0
    %1286 = vmatpush2.msra.mxu0 0.0
    %1287 = vmatprep.subr.mxu0 0.0
    %1288 = vmatpush2.msra.mxu0 0.0
    %1289 = vmatprep.subr.mxu0 0.0
    %1290 = vmatpush2.msra.mxu0 0.0
    %1291 = vmatprep.subr.mxu0 0.0
    %1292 = vmatpush2.msra.mxu0 0.0
    %1293 = vmatprep.subr.mxu0 0.0
    %1294 = vmatpush2.msra.mxu0 0.0
    %1295 = vmatprep.subr.mxu0 0.0
    %1296 = vmatpush2.msra.mxu0 0.0
    %1297 = vmatprep.subr.mxu0 0.0
    %1298 = vmatpush2.msra.mxu0 0.0
    %1299 = vmatprep.subr.mxu0 0.0
    %1300 = vmatpush2.msra.mxu0 0.0
    %1301 = vmatprep.subr.mxu0 0.0
    %1302 = vmatpush2.msra.mxu0 0.0
    %1303 = vmatprep.subr.mxu0 0.0
    %1304 = vmatpush2.msra.mxu0 0.0
    %1305 = vmatprep.mubr.f32.mxu0 0.0
    %1306 = vmatmul.mubr.f32.gmra.mxu0 %v1230
    %v1307 = vpop.f32.mrf.mxu0
    %v1308 = vadd.f32 0.0, %v1307
    %v1309 = vpop.f32.mrf.mxu0
    %1310 = vmatprep.mubr.f32.mxu0 0.0
    %1311 = vmatmul.mubr.f32.gmra.mxu0 %v1233
    %v1312 = vpop.f32.mrf.mxu0
    %v1313 = vadd.f32 0.0, %v1312
    %v1314 = vpop.f32.mrf.mxu0
    %1315 = vmatprep.mubr.f32.mxu0 0.0
    %1316 = vmatmul.mubr.f32.gmra.mxu0 %v1236
    %v1317 = vpop.f32.mrf.mxu0
    %v1318 = vadd.f32 0.0, %v1317
    %v1319 = vpop.f32.mrf.mxu0
    %1320 = vmatprep.mubr.f32.mxu0 0.0
    %1321 = vmatmul.mubr.f32.gmra.mxu0 %v1239
    %v1322 = vpop.f32.mrf.mxu0
    %v1323 = vadd.f32 0.0, %v1322
    %v1324 = vpop.f32.mrf.mxu0
    %1325 = vdwg.mxu0
    %1326 = vrot.lane.b32.xlu0 %v429, 112
    %v1327 = vpop.permute.xlu0 %1326
    %1328 = vrot.lane.b32.xlu0 %v434, 112
    %v1329 = vpop.permute.xlu0 %1328
    %1330 = vrot.lane.b32.xlu0 %v439, 112
    %v1331 = vpop.permute.xlu0 %1330
    %1332 = vrot.lane.b32.xlu0 %v444, 112
    %v1333 = vpop.permute.xlu0 %1332
    %v1339 = vsel %vm121, %v1108, 0
    %v1342 = vsel %vm121, %v1109, 0
    %v1345 = vsel %vm121, %v1110, 0
    %v1348 = vsel %vm121, %v1111, 0
    %1350 = vmatprep.subr.mxu0 0.0
    %1351 = vmatpush1.msra.mxu0 0.0
    %1352 = vmatprep.subr.mxu0 0.0
    %1353 = vmatpush1.msra.mxu0 0.0
    %1354 = vmatprep.subr.mxu0 0.0
    %1355 = vmatpush1.msra.mxu0 0.0
    %1356 = vmatprep.subr.mxu0 0.0
    %1357 = vmatpush1.msra.mxu0 0.0
    %1358 = vmatprep.subr.mxu0 0.0
    %1359 = vmatpush1.msra.mxu0 0.0
    %1360 = vmatprep.subr.mxu0 0.0
    %1361 = vmatpush1.msra.mxu0 0.0
    %1362 = vmatprep.subr.mxu0 0.0
    %1363 = vmatpush1.msra.mxu0 0.0
    %1364 = vmatprep.subr.mxu0 0.0
    %1365 = vmatpush1.msra.mxu0 0.0
    %1366 = vmatprep.subr.mxu0 0.0
    %1367 = vmatpush1.msra.mxu0 0.0
    %1368 = vmatprep.subr.mxu0 0.0
    %1369 = vmatpush1.msra.mxu0 0.0
    %1370 = vmatprep.subr.mxu0 0.0
    %1371 = vmatpush1.msra.mxu0 0.0
    %1372 = vmatprep.subr.mxu0 0.0
    %1373 = vmatpush1.msra.mxu0 0.0
    %1374 = vmatprep.subr.mxu0 0.0
    %1375 = vmatpush1.msra.mxu0 %v1333
    %1376 = vmatprep.subr.mxu0 0.0
    %1377 = vmatpush1.msra.mxu0 %v1331
    %1378 = vmatprep.subr.mxu0 0.0
    %1379 = vmatpush1.msra.mxu0 %v1329
    %1380 = vmatprep.subr.mxu0 0.0
    %1381 = vmatpush1.msra.mxu0 %v1327
    %1382 = vmatprep.subr.mxu0 0.0
    %1383 = vmatpush2.msra.mxu0 0.0
    %1384 = vmatprep.subr.mxu0 0.0
    %1385 = vmatpush2.msra.mxu0 0.0
    %1386 = vmatprep.subr.mxu0 0.0
    %1387 = vmatpush2.msra.mxu0 0.0
    %1388 = vmatprep.subr.mxu0 0.0
    %1389 = vmatpush2.msra.mxu0 0.0
    %1390 = vmatprep.subr.mxu0 0.0
    %1391 = vmatpush2.msra.mxu0 0.0
    %1392 = vmatprep.subr.mxu0 0.0
    %1393 = vmatpush2.msra.mxu0 0.0
    %1394 = vmatprep.subr.mxu0 0.0
    %1395 = vmatpush2.msra.mxu0 0.0
    %1396 = vmatprep.subr.mxu0 0.0
    %1397 = vmatpush2.msra.mxu0 0.0
    %1398 = vmatprep.subr.mxu0 0.0
    %1399 = vmatpush2.msra.mxu0 0.0
    %1400 = vmatprep.subr.mxu0 0.0
    %1401 = vmatpush2.msra.mxu0 0.0
    %1402 = vmatprep.subr.mxu0 0.0
    %1403 = vmatpush2.msra.mxu0 0.0
    %1404 = vmatprep.subr.mxu0 0.0
    %1405 = vmatpush2.msra.mxu0 0.0
    %1406 = vmatprep.subr.mxu0 0.0
    %1407 = vmatpush2.msra.mxu0 0.0
    %1408 = vmatprep.subr.mxu0 0.0
    %1409 = vmatpush2.msra.mxu0 0.0
    %1410 = vmatprep.subr.mxu0 0.0
    %1411 = vmatpush2.msra.mxu0 0.0
    %1412 = vmatprep.subr.mxu0 0.0
    %1413 = vmatpush2.msra.mxu0 0.0
    %1414 = vmatprep.mubr.f32.mxu0 0.0
    %1415 = vmatmul.mubr.f32.gmra.mxu0 %v1339
    %v1416 = vpop.f32.mrf.mxu0
    %v1417 = vadd.f32 0.0, %v1416
    %v1418 = vpop.f32.mrf.mxu0
    %1419 = vmatprep.mubr.f32.mxu0 0.0
    %1420 = vmatmul.mubr.f32.gmra.mxu0 %v1342
    %v1421 = vpop.f32.mrf.mxu0
    %v1422 = vadd.f32 0.0, %v1421
    %v1423 = vpop.f32.mrf.mxu0
    %1424 = vmatprep.mubr.f32.mxu0 0.0
    %1425 = vmatmul.mubr.f32.gmra.mxu0 %v1345
    %v1426 = vpop.f32.mrf.mxu0
    %v1427 = vadd.f32 0.0, %v1426
    %v1428 = vpop.f32.mrf.mxu0
    %1429 = vmatprep.mubr.f32.mxu0 0.0
    %1430 = vmatmul.mubr.f32.gmra.mxu0 %v1348
    %v1431 = vpop.f32.mrf.mxu0
    %v1432 = vadd.f32 0.0, %v1431
    %v1433 = vpop.f32.mrf.mxu0
    %1434 = vdwg.mxu0
    %1435 = vrot.lane.b32.xlu0 %v429, 104
    %v1436 = vpop.permute.xlu0 %1435
    %1437 = vrot.lane.b32.xlu0 %v434, 104
    %v1438 = vpop.permute.xlu0 %1437
    %1439 = vrot.lane.b32.xlu0 %v439, 104
    %v1440 = vpop.permute.xlu0 %1439
    %1441 = vrot.lane.b32.xlu0 %v444, 104
    %v1442 = vpop.permute.xlu0 %1441
    %v1448 = vsel %vm121, %v1112, 0
    %v1451 = vsel %vm121, %v1113, 0
    %v1454 = vsel %vm121, %v1114, 0
    %v1457 = vsel %vm121, %v1115, 0
    %1459 = vmatprep.subr.mxu0 0.0
    %1460 = vmatpush1.msra.mxu0 0.0
    %1461 = vmatprep.subr.mxu0 0.0
    %1462 = vmatpush1.msra.mxu0 0.0
    %1463 = vmatprep.subr.mxu0 0.0
    %1464 = vmatpush1.msra.mxu0 0.0
    %1465 = vmatprep.subr.mxu0 0.0
    %1466 = vmatpush1.msra.mxu0 0.0
    %1467 = vmatprep.subr.mxu0 0.0
    %1468 = vmatpush1.msra.mxu0 0.0
    %1469 = vmatprep.subr.mxu0 0.0
    %1470 = vmatpush1.msra.mxu0 0.0
    %1471 = vmatprep.subr.mxu0 0.0
    %1472 = vmatpush1.msra.mxu0 0.0
    %1473 = vmatprep.subr.mxu0 0.0
    %1474 = vmatpush1.msra.mxu0 0.0
    %1475 = vmatprep.subr.mxu0 0.0
    %1476 = vmatpush1.msra.mxu0 0.0
    %1477 = vmatprep.subr.mxu0 0.0
    %1478 = vmatpush1.msra.mxu0 0.0
    %1479 = vmatprep.subr.mxu0 0.0
    %1480 = vmatpush1.msra.mxu0 0.0
    %1481 = vmatprep.subr.mxu0 0.0
    %1482 = vmatpush1.msra.mxu0 0.0
    %1483 = vmatprep.subr.mxu0 0.0
    %1484 = vmatpush1.msra.mxu0 %v1442
    %1485 = vmatprep.subr.mxu0 0.0
    %1486 = vmatpush1.msra.mxu0 %v1440
    %1487 = vmatprep.subr.mxu0 0.0
    %1488 = vmatpush1.msra.mxu0 %v1438
    %1489 = vmatprep.subr.mxu0 0.0
    %1490 = vmatpush1.msra.mxu0 %v1436
    %1491 = vmatprep.subr.mxu0 0.0
    %1492 = vmatpush2.msra.mxu0 0.0
    %1493 = vmatprep.subr.mxu0 0.0
    %1494 = vmatpush2.msra.mxu0 0.0
    %1495 = vmatprep.subr.mxu0 0.0
    %1496 = vmatpush2.msra.mxu0 0.0
    %1497 = vmatprep.subr.mxu0 0.0
    %1498 = vmatpush2.msra.mxu0 0.0
    %1499 = vmatprep.subr.mxu0 0.0
    %1500 = vmatpush2.msra.mxu0 0.0
    %1501 = vmatprep.subr.mxu0 0.0
    %1502 = vmatpush2.msra.mxu0 0.0
    %1503 = vmatprep.subr.mxu0 0.0
    %1504 = vmatpush2.msra.mxu0 0.0
    %1505 = vmatprep.subr.mxu0 0.0
    %1506 = vmatpush2.msra.mxu0 0.0
    %1507 = vmatprep.subr.mxu0 0.0
    %1508 = vmatpush2.msra.mxu0 0.0
    %1509 = vmatprep.subr.mxu0 0.0
    %1510 = vmatpush2.msra.mxu0 0.0
    %1511 = vmatprep.subr.mxu0 0.0
    %1512 = vmatpush2.msra.mxu0 0.0
    %1513 = vmatprep.subr.mxu0 0.0
    %1514 = vmatpush2.msra.mxu0 0.0
    %1515 = vmatprep.subr.mxu0 0.0
    %1516 = vmatpush2.msra.mxu0 0.0
    %1517 = vmatprep.subr.mxu0 0.0
    %1518 = vmatpush2.msra.mxu0 0.0
    %1519 = vmatprep.subr.mxu0 0.0
    %1520 = vmatpush2.msra.mxu0 0.0
    %1521 = vmatprep.subr.mxu0 0.0
    %1522 = vmatpush2.msra.mxu0 0.0
    %1523 = vmatprep.mubr.f32.mxu0 0.0
    %1524 = vmatmul.mubr.f32.gmra.mxu0 %v1448
    %v1525 = vpop.f32.mrf.mxu0
    %v1526 = vadd.f32 0.0, %v1525
    %v1527 = vpop.f32.mrf.mxu0
    %1528 = vmatprep.mubr.f32.mxu0 0.0
    %1529 = vmatmul.mubr.f32.gmra.mxu0 %v1451
    %v1530 = vpop.f32.mrf.mxu0
    %v1531 = vadd.f32 0.0, %v1530
    %v1532 = vpop.f32.mrf.mxu0
    %1533 = vmatprep.mubr.f32.mxu0 0.0
    %1534 = vmatmul.mubr.f32.gmra.mxu0 %v1454
    %v1535 = vpop.f32.mrf.mxu0
    %v1536 = vadd.f32 0.0, %v1535
    %v1537 = vpop.f32.mrf.mxu0
    %1538 = vmatprep.mubr.f32.mxu0 0.0
    %1539 = vmatmul.mubr.f32.gmra.mxu0 %v1457
    %v1540 = vpop.f32.mrf.mxu0
    %v1541 = vadd.f32 0.0, %v1540
    %v1542 = vpop.f32.mrf.mxu0
    %1543 = vdwg.mxu0
    %1548 = vrot.lane.b32.xlu0 %v1308, 8
    %v1549 = vpop.permute.xlu0 %1548
    %1550 = vrot.lane.b32.xlu0 %v1313, 8
    %v1551 = vpop.permute.xlu0 %1550
    %1552 = vrot.lane.b32.xlu0 %v1318, 8
    %v1553 = vpop.permute.xlu0 %1552
    %1554 = vrot.lane.b32.xlu0 %v1323, 8
    %v1555 = vpop.permute.xlu0 %1554
    %1564 = vrot.lane.b32.xlu0 %v1417, 16
    %v1565 = vpop.permute.xlu0 %1564
    %1566 = vrot.lane.b32.xlu0 %v1422, 16
    %v1567 = vpop.permute.xlu0 %1566
    %1568 = vrot.lane.b32.xlu0 %v1427, 16
    %v1569 = vpop.permute.xlu0 %1568
    %1570 = vrot.lane.b32.xlu0 %v1432, 16
    %v1571 = vpop.permute.xlu0 %1570
    %1580 = vrot.lane.b32.xlu0 %v1526, 24
    %v1581 = vpop.permute.xlu0 %1580
    %1582 = vrot.lane.b32.xlu0 %v1531, 24
    %v1583 = vpop.permute.xlu0 %1582
    %1584 = vrot.lane.b32.xlu0 %v1536, 24
    %v1585 = vpop.permute.xlu0 %1584
    %1586 = vrot.lane.b32.xlu0 %v1541, 24
    %v1587 = vpop.permute.xlu0 %1586
    %v1592 = vsel %vm447, %v1195, %v1549
    %v1593 = vsel %vm447, %v1200, %v1551
    %v1594 = vsel %vm447, %v1205, %v1553
    %v1595 = vsel %vm447, %v1210, %v1555
    %vm1596 = vcmask 130048
    %v1597 = vsel %vm1596, %v1592, %v1565
    %v1598 = vsel %vm1596, %v1593, %v1567
    %v1599 = vsel %vm1596, %v1594, %v1569
    %v1600 = vsel %vm1596, %v1595, %v1571
    %vm1601 = vcmask 195584
    %v1602 = vsel %vm1601, %v1597, %v1581
    %v1603 = vsel %vm1601, %v1598, %v1583
    %v1604 = vsel %vm1601, %v1599, %v1585
    %v1605 = vsel %vm1601, %v1600, %v1587
    %v1606 = vld [vmem:[#allocation5] sm:$0xff]
    %v1607 = vld [vmem:[#allocation5 + $0x8] sm:$0xff]
    %v1608 = vld [vmem:[#allocation5 + $0x10] sm:$0xff]
    %v1609 = vld [vmem:[#allocation5 + $0x18] sm:$0xff]
    %v1611 = vsel %vm121, %v1602, 0
    %v1614 = vsel %vm121, %v1603, 0
    %v1617 = vsel %vm121, %v1604, 0
    %v1620 = vsel %vm121, %v1605, 0
    %1622 = vmatprep.subr.mxu0 0.0
    %1623 = vmatpush1.msra.mxu0 0.0
    %1624 = vmatprep.subr.mxu0 0.0
    %1625 = vmatpush1.msra.mxu0 0.0
    %1626 = vmatprep.subr.mxu0 0.0
    %1627 = vmatpush1.msra.mxu0 0.0
    %1628 = vmatprep.subr.mxu0 0.0
    %1629 = vmatpush1.msra.mxu0 0.0
    %1630 = vmatprep.subr.mxu0 0.0
    %1631 = vmatpush1.msra.mxu0 0.0
    %1632 = vmatprep.subr.mxu0 0.0
    %1633 = vmatpush1.msra.mxu0 0.0
    %1634 = vmatprep.subr.mxu0 0.0
    %1635 = vmatpush1.msra.mxu0 0.0
    %1636 = vmatprep.subr.mxu0 0.0
    %1637 = vmatpush1.msra.mxu0 0.0
    %1638 = vmatprep.subr.mxu0 0.0
    %1639 = vmatpush1.msra.mxu0 0.0
    %1640 = vmatprep.subr.mxu0 0.0
    %1641 = vmatpush1.msra.mxu0 0.0
    %1642 = vmatprep.subr.mxu0 0.0
    %1643 = vmatpush1.msra.mxu0 0.0
    %1644 = vmatprep.subr.mxu0 0.0
    %1645 = vmatpush1.msra.mxu0 0.0
    %1646 = vmatprep.subr.mxu0 0.0
    %1647 = vmatpush1.msra.mxu0 %v1609
    %1648 = vmatprep.subr.mxu0 0.0
    %1649 = vmatpush1.msra.mxu0 %v1608
    %1650 = vmatprep.subr.mxu0 0.0
    %1651 = vmatpush1.msra.mxu0 %v1607
    %1652 = vmatprep.subr.mxu0 0.0
    %1653 = vmatpush1.msra.mxu0 %v1606
    %1654 = vmatprep.subr.mxu0 0.0
    %1655 = vmatpush2.msra.mxu0 0.0
    %1656 = vmatprep.subr.mxu0 0.0
    %1657 = vmatpush2.msra.mxu0 0.0
    %1658 = vmatprep.subr.mxu0 0.0
    %1659 = vmatpush2.msra.mxu0 0.0
    %1660 = vmatprep.subr.mxu0 0.0
    %1661 = vmatpush2.msra.mxu0 0.0
    %1662 = vmatprep.subr.mxu0 0.0
    %1663 = vmatpush2.msra.mxu0 0.0
    %1664 = vmatprep.subr.mxu0 0.0
    %1665 = vmatpush2.msra.mxu0 0.0
    %1666 = vmatprep.subr.mxu0 0.0
    %1667 = vmatpush2.msra.mxu0 0.0
    %1668 = vmatprep.subr.mxu0 0.0
    %1669 = vmatpush2.msra.mxu0 0.0
    %1670 = vmatprep.subr.mxu0 0.0
    %1671 = vmatpush2.msra.mxu0 0.0
    %1672 = vmatprep.subr.mxu0 0.0
    %1673 = vmatpush2.msra.mxu0 0.0
    %1674 = vmatprep.subr.mxu0 0.0
    %1675 = vmatpush2.msra.mxu0 0.0
    %1676 = vmatprep.subr.mxu0 0.0
    %1677 = vmatpush2.msra.mxu0 0.0
    %1678 = vmatprep.subr.mxu0 0.0
    %1679 = vmatpush2.msra.mxu0 0.0
    %1680 = vmatprep.subr.mxu0 0.0
    %1681 = vmatpush2.msra.mxu0 0.0
    %1682 = vmatprep.subr.mxu0 0.0
    %1683 = vmatpush2.msra.mxu0 0.0
    %1684 = vmatprep.subr.mxu0 0.0
    %1685 = vmatpush2.msra.mxu0 0.0
    %1686 = vmatprep.mubr.f32.mxu0 0.0
    %1687 = vmatmul.mubr.f32.gmra.mxu0 %v1611
    %v1688 = vpop.f32.mrf.mxu0
    %v1689 = vadd.f32 0.0, %v1688
    %v1690 = vpop.f32.mrf.mxu0
    %1691 = vmatprep.mubr.f32.mxu0 0.0
    %1692 = vmatmul.mubr.f32.gmra.mxu0 %v1614
    %v1693 = vpop.f32.mrf.mxu0
    %v1694 = vadd.f32 0.0, %v1693
    %v1695 = vpop.f32.mrf.mxu0
    %1696 = vmatprep.mubr.f32.mxu0 0.0
    %1697 = vmatmul.mubr.f32.gmra.mxu0 %v1617
    %v1698 = vpop.f32.mrf.mxu0
    %v1699 = vadd.f32 0.0, %v1698
    %v1700 = vpop.f32.mrf.mxu0
    %1701 = vmatprep.mubr.f32.mxu0 0.0
    %1702 = vmatmul.mubr.f32.gmra.mxu0 %v1620
    %v1703 = vpop.f32.mrf.mxu0
    %v1704 = vadd.f32 0.0, %v1703
    %v1705 = vpop.f32.mrf.mxu0
    %1706 = vdwg.mxu0
    %v1707 = vadd.f32 %v113, %v1689
    %v1708 = vadd.f32 %v114, %v1694
    %v1709 = vadd.f32 %v115, %v1699
    %v1710 = vadd.f32 %v116, %v1704
    %v1711 = vld [vmem:[%s8] sm:$0x1]
    %v1713 = vlaneseq
    %v1714 = vshrl.u32 %v1713, 7
    %v1715 = vsub.s32 0, %v1714
    %v1716 = vrot.slane %v1711, %v1715
    %v1718 = vadd.f32 %v1707, %v1716
    %v1719 = vadd.f32 %v1708, %v1716
    %v1720 = vadd.f32 %v1709, %v1716
    %v1721 = vadd.f32 %v1710, %v1716
    %v1722 = vmul.f32 %v1718, %v1718
    %v1723 = vmul.f32 %v1719, %v1719
    %v1724 = vmul.f32 %v1720, %v1720
    %v1725 = vmul.f32 %v1721, %v1721
    %v1726 = vsel %vm121, %v1722, 0.0
    %1727 = vadd.xlane.f32.xlu0 %v1726
    %v1728 = vpop.xlane.xlu0 %1727
    %v1729 = vsel %vm121, %v1723, 0.0
    %1730 = vadd.xlane.f32.xlu0 %v1729
    %v1731 = vpop.xlane.xlu0 %1730
    %v1732 = vsel %vm121, %v1724, 0.0
    %1733 = vadd.xlane.f32.xlu0 %v1732
    %v1734 = vpop.xlane.xlu0 %1733
    %v1735 = vsel %vm121, %v1725, 0.0
    %1736 = vadd.xlane.f32.xlu0 %v1735
    %v1737 = vpop.xlane.xlu0 %1736
    %v1738 = vmul.f32 %v1728, %v134
    %v1739 = vmul.f32 %v1731, %v134
    %v1740 = vmul.f32 %v1734, %v134
    %v1741 = vmul.f32 %v1737, %v134
    %v1742 = vrsqrt.pop %v1738
    %v1743 = vrsqrt.pop %v1739
    %v1744 = vrsqrt.pop %v1740
    %v1745 = vrsqrt.pop %v1741
    %v1746 = vmul.f32 %v1718, %v1742
    %v1747 = vmul.f32 %v1719, %v1743
    %v1748 = vmul.f32 %v1720, %v1744
    %v1749 = vmul.f32 %v1721, %v1745
    %v1750 = vld [vmem:[#allocation8] sm:$0xff]
    %v1751 = vld [vmem:[#allocation8 + $0x8] sm:$0xff]
    %v1752 = vld [vmem:[#allocation8 + $0x10] sm:$0xff]
    %v1753 = vld [vmem:[#allocation8 + $0x18] sm:$0xff]
    %v1755 = vsel %vm121, %v1746, 0
    %v1758 = vsel %vm121, %v1747, 0
    %v1761 = vsel %vm121, %v1748, 0
    %v1764 = vsel %vm121, %v1749, 0
    %1766 = vmatprep.subr.mxu0 0.0
    %1767 = vmatpush1.msra.mxu0 0.0
    %1768 = vmatprep.subr.mxu0 0.0
    %1769 = vmatpush1.msra.mxu0 0.0
    %1770 = vmatprep.subr.mxu0 0.0
    %1771 = vmatpush1.msra.mxu0 0.0
    %1772 = vmatprep.subr.mxu0 0.0
    %1773 = vmatpush1.msra.mxu0 0.0
    %1774 = vmatprep.subr.mxu0 0.0
    %1775 = vmatpush1.msra.mxu0 0.0
    %1776 = vmatprep.subr.mxu0 0.0
    %1777 = vmatpush1.msra.mxu0 0.0
    %1778 = vmatprep.subr.mxu0 0.0
    %1779 = vmatpush1.msra.mxu0 0.0
    %1780 = vmatprep.subr.mxu0 0.0
    %1781 = vmatpush1.msra.mxu0 0.0
    %1782 = vmatprep.subr.mxu0 0.0
    %1783 = vmatpush1.msra.mxu0 0.0
    %1784 = vmatprep.subr.mxu0 0.0
    %1785 = vmatpush1.msra.mxu0 0.0
    %1786 = vmatprep.subr.mxu0 0.0
    %1787 = vmatpush1.msra.mxu0 0.0
    %1788 = vmatprep.subr.mxu0 0.0
    %1789 = vmatpush1.msra.mxu0 0.0
    %1790 = vmatprep.subr.mxu0 0.0
    %1791 = vmatpush1.msra.mxu0 %v1753
    %1792 = vmatprep.subr.mxu0 0.0
    %1793 = vmatpush1.msra.mxu0 %v1752
    %1794 = vmatprep.subr.mxu0 0.0
    %1795 = vmatpush1.msra.mxu0 %v1751
    %1796 = vmatprep.subr.mxu0 0.0
    %1797 = vmatpush1.msra.mxu0 %v1750
    %1798 = vmatprep.subr.mxu0 0.0
    %1799 = vmatpush2.msra.mxu0 0.0
    %1800 = vmatprep.subr.mxu0 0.0
    %1801 = vmatpush2.msra.mxu0 0.0
    %1802 = vmatprep.subr.mxu0 0.0
    %1803 = vmatpush2.msra.mxu0 0.0
    %1804 = vmatprep.subr.mxu0 0.0
    %1805 = vmatpush2.msra.mxu0 0.0
    %1806 = vmatprep.subr.mxu0 0.0
    %1807 = vmatpush2.msra.mxu0 0.0
    %1808 = vmatprep.subr.mxu0 0.0
    %1809 = vmatpush2.msra.mxu0 0.0
    %1810 = vmatprep.subr.mxu0 0.0
    %1811 = vmatpush2.msra.mxu0 0.0
    %1812 = vmatprep.subr.mxu0 0.0
    %1813 = vmatpush2.msra.mxu0 0.0
    %1814 = vmatprep.subr.mxu0 0.0
    %1815 = vmatpush2.msra.mxu0 0.0
    %1816 = vmatprep.subr.mxu0 0.0
    %1817 = vmatpush2.msra.mxu0 0.0
    %1818 = vmatprep.subr.mxu0 0.0
    %1819 = vmatpush2.msra.mxu0 0.0
    %1820 = vmatprep.subr.mxu0 0.0
    %1821 = vmatpush2.msra.mxu0 0.0
    %1822 = vmatprep.subr.mxu0 0.0
    %1823 = vmatpush2.msra.mxu0 0.0
    %1824 = vmatprep.subr.mxu0 0.0
    %1825 = vmatpush2.msra.mxu0 0.0
    %1826 = vmatprep.subr.mxu0 0.0
    %1827 = vmatpush2.msra.mxu0 0.0
    %1828 = vmatprep.subr.mxu0 0.0
    %1829 = vmatpush2.msra.mxu0 0.0
    %1830 = vmatprep.mubr.f32.mxu0 0.0
    %1831 = vmatmul.mubr.f32.gmra.mxu0 %v1755
    %v1832 = vpop.f32.mrf.mxu0
    %v1833 = vadd.f32 0.0, %v1832
    %v1834 = vpop.f32.mrf.mxu0
    %1835 = vmatprep.mubr.f32.mxu0 0.0
    %1836 = vmatmul.mubr.f32.gmra.mxu0 %v1758
    %v1837 = vpop.f32.mrf.mxu0
    %v1838 = vadd.f32 0.0, %v1837
    %v1839 = vpop.f32.mrf.mxu0
    %1840 = vmatprep.mubr.f32.mxu0 0.0
    %1841 = vmatmul.mubr.f32.gmra.mxu0 %v1761
    %v1842 = vpop.f32.mrf.mxu0
    %v1843 = vadd.f32 0.0, %v1842
    %v1844 = vpop.f32.mrf.mxu0
    %1845 = vmatprep.mubr.f32.mxu0 0.0
    %1846 = vmatmul.mubr.f32.gmra.mxu0 %v1764
    %v1847 = vpop.f32.mrf.mxu0
    %v1848 = vadd.f32 0.0, %v1847
    %v1849 = vpop.f32.mrf.mxu0
    %1850 = vdwg.mxu0
    %v1851 = vld [vmem:[#allocation10] sm:$0xff]
    %v1852 = vld [vmem:[#allocation10 + $0x8] sm:$0xff]
    %v1853 = vld [vmem:[#allocation10 + $0x10] sm:$0xff]
    %v1854 = vld [vmem:[#allocation10 + $0x18] sm:$0xff]
    %1855 = vmatprep.subr.mxu0 0.0
    %1856 = vmatpush1.msra.mxu0 0.0
    %1857 = vmatprep.subr.mxu0 0.0
    %1858 = vmatpush1.msra.mxu0 0.0
    %1859 = vmatprep.subr.mxu0 0.0
    %1860 = vmatpush1.msra.mxu0 0.0
    %1861 = vmatprep.subr.mxu0 0.0
    %1862 = vmatpush1.msra.mxu0 0.0
    %1863 = vmatprep.subr.mxu0 0.0
    %1864 = vmatpush1.msra.mxu0 0.0
    %1865 = vmatprep.subr.mxu0 0.0
    %1866 = vmatpush1.msra.mxu0 0.0
    %1867 = vmatprep.subr.mxu0 0.0
    %1868 = vmatpush1.msra.mxu0 0.0
    %1869 = vmatprep.subr.mxu0 0.0
    %1870 = vmatpush1.msra.mxu0 0.0
    %1871 = vmatprep.subr.mxu0 0.0
    %1872 = vmatpush1.msra.mxu0 0.0
    %1873 = vmatprep.subr.mxu0 0.0
    %1874 = vmatpush1.msra.mxu0 0.0
    %1875 = vmatprep.subr.mxu0 0.0
    %1876 = vmatpush1.msra.mxu0 0.0
    %1877 = vmatprep.subr.mxu0 0.0
    %1878 = vmatpush1.msra.mxu0 0.0
    %1879 = vmatprep.subr.mxu0 0.0
    %1880 = vmatpush1.msra.mxu0 %v1854
    %1881 = vmatprep.subr.mxu0 0.0
    %1882 = vmatpush1.msra.mxu0 %v1853
    %1883 = vmatprep.subr.mxu0 0.0
    %1884 = vmatpush1.msra.mxu0 %v1852
    %1885 = vmatprep.subr.mxu0 0.0
    %1886 = vmatpush1.msra.mxu0 %v1851
    %1887 = vmatprep.subr.mxu0 0.0
    %1888 = vmatpush2.msra.mxu0 0.0
    %1889 = vmatprep.subr.mxu0 0.0
    %1890 = vmatpush2.msra.mxu0 0.0
    %1891 = vmatprep.subr.mxu0 0.0
    %1892 = vmatpush2.msra.mxu0 0.0
    %1893 = vmatprep.subr.mxu0 0.0
    %1894 = vmatpush2.msra.mxu0 0.0
    %1895 = vmatprep.subr.mxu0 0.0
    %1896 = vmatpush2.msra.mxu0 0.0
    %1897 = vmatprep.subr.mxu0 0.0
    %1898 = vmatpush2.msra.mxu0 0.0
    %1899 = vmatprep.subr.mxu0 0.0
    %1900 = vmatpush2.msra.mxu0 0.0
    %1901 = vmatprep.subr.mxu0 0.0
    %1902 = vmatpush2.msra.mxu0 0.0
    %1903 = vmatprep.subr.mxu0 0.0
    %1904 = vmatpush2.msra.mxu0 0.0
    %1905 = vmatprep.subr.mxu0 0.0
    %1906 = vmatpush2.msra.mxu0 0.0
    %1907 = vmatprep.subr.mxu0 0.0
    %1908 = vmatpush2.msra.mxu0 0.0
    %1909 = vmatprep.subr.mxu0 0.0
    %1910 = vmatpush2.msra.mxu0 0.0
    %1911 = vmatprep.subr.mxu0 0.0
    %1912 = vmatpush2.msra.mxu0 0.0
    %1913 = vmatprep.subr.mxu0 0.0
    %1914 = vmatpush2.msra.mxu0 0.0
    %1915 = vmatprep.subr.mxu0 0.0
    %1916 = vmatpush2.msra.mxu0 0.0
    %1917 = vmatprep.subr.mxu0 0.0
    %1918 = vmatpush2.msra.mxu0 0.0
    %1919 = vmatprep.mubr.f32.mxu0 0.0
    %1920 = vmatmul.mubr.f32.gmra.mxu0 %v1755
    %v1921 = vpop.f32.mrf.mxu0
    %v1922 = vadd.f32 0.0, %v1921
    %v1923 = vpop.f32.mrf.mxu0
    %1924 = vmatprep.mubr.f32.mxu0 0.0
    %1925 = vmatmul.mubr.f32.gmra.mxu0 %v1758
    %v1926 = vpop.f32.mrf.mxu0
    %v1927 = vadd.f32 0.0, %v1926
    %v1928 = vpop.f32.mrf.mxu0
    %1929 = vmatprep.mubr.f32.mxu0 0.0
    %1930 = vmatmul.mubr.f32.gmra.mxu0 %v1761
    %v1931 = vpop.f32.mrf.mxu0
    %v1932 = vadd.f32 0.0, %v1931
    %v1933 = vpop.f32.mrf.mxu0
    %1934 = vmatprep.mubr.f32.mxu0 0.0
    %1935 = vmatmul.mubr.f32.gmra.mxu0 %v1764
    %v1936 = vpop.f32.mrf.mxu0
    %v1937 = vadd.f32 0.0, %v1936
    %v1938 = vpop.f32.mrf.mxu0
    %1939 = vdwg.mxu0
    %v1940 = vmul.f32 %v1833, %v1833
    %v1941 = vmul.f32 %v1838, %v1838
    %v1942 = vmul.f32 %v1843, %v1843
    %v1943 = vmul.f32 %v1848, %v1848
    %v1944 = vmul.f32 %v1833, %v1940
    %v1945 = vmul.f32 %v1838, %v1941
    %v1946 = vmul.f32 %v1843, %v1942
    %v1947 = vmul.f32 %v1848, %v1943
    %v1948 = vmul.f32 %v1944, 0.044715
    %v1949 = vmul.f32 %v1945, 0.044715
    %v1950 = vmul.f32 %v1946, 0.044715
    %v1951 = vmul.f32 %v1947, 0.044715
    %v1952 = vadd.f32 %v1833, %v1948
    %v1953 = vadd.f32 %v1838, %v1949
    %v1954 = vadd.f32 %v1843, %v1950
    %v1955 = vadd.f32 %v1848, %v1951
    %v1956 = vmul.f32 %v1952, 0.7978846
    %v1957 = vmul.f32 %v1953, 0.7978846
    %v1958 = vmul.f32 %v1954, 0.7978846
    %v1959 = vmul.f32 %v1955, 0.7978846
    %v1960 = vtanh.pop %v1956
    %v1961 = vtanh.pop %v1957
    %v1962 = vtanh.pop %v1958
    %v1963 = vtanh.pop %v1959
    %v1964 = vadd.f32 %v1960, 1.0
    %v1965 = vadd.f32 %v1961, 1.0
    %v1966 = vadd.f32 %v1962, 1.0
    %v1967 = vadd.f32 %v1963, 1.0
    %v1968 = vmul.f32 %v1964, 0.5
    %v1969 = vmul.f32 %v1965, 0.5
    %v1970 = vmul.f32 %v1966, 0.5
    %v1971 = vmul.f32 %v1967, 0.5
    %v1972 = vmul.f32 %v1833, %v1968
    %v1973 = vmul.f32 %v1838, %v1969
    %v1974 = vmul.f32 %v1843, %v1970
    %v1975 = vmul.f32 %v1848, %v1971
    %v1976 = vmul.f32 %v1972, %v1922
    %v1977 = vmul.f32 %v1973, %v1927
    %v1978 = vmul.f32 %v1974, %v1932
    %v1979 = vmul.f32 %v1975, %v1937
    %v1980 = vld [vmem:[%s12] sm:$0xff]
    %v1981 = vld [vmem:[%s12 + $0x8] sm:$0xff]
    %v1982 = vld [vmem:[%s12 + $0x10] sm:$0xff]
    %v1983 = vld [vmem:[%s12 + $0x18] sm:$0xff]
    %v1984 = vld [vmem:[%s12 + $0x20] sm:$0xff]
    %v1985 = vld [vmem:[%s12 + $0x28] sm:$0xff]
    %v1986 = vld [vmem:[%s12 + $0x30] sm:$0xff]
    %v1987 = vld [vmem:[%s12 + $0x38] sm:$0xff]
    %vm1988 = vcmask 523264
    %v1990 = vsel %vm1988, %v1976, 0
    %v1993 = vsel %vm1988, %v1977, 0
    %v1996 = vsel %vm1988, %v1978, 0
    %v1999 = vsel %vm1988, %v1979, 0
    %2001 = vmatprep.subr.mxu0 0.0
    %2002 = vmatpush1.msra.mxu0 0.0
    %2003 = vmatprep.subr.mxu0 0.0
    %2004 = vmatpush1.msra.mxu0 0.0
    %2005 = vmatprep.subr.mxu0 0.0
    %2006 = vmatpush1.msra.mxu0 0.0
    %2007 = vmatprep.subr.mxu0 0.0
    %2008 = vmatpush1.msra.mxu0 0.0
    %2009 = vmatprep.subr.mxu0 0.0
    %2010 = vmatpush1.msra.mxu0 0.0
    %2011 = vmatprep.subr.mxu0 0.0
    %2012 = vmatpush1.msra.mxu0 0.0
    %2013 = vmatprep.subr.mxu0 0.0
    %2014 = vmatpush1.msra.mxu0 0.0
    %2015 = vmatprep.subr.mxu0 0.0
    %2016 = vmatpush1.msra.mxu0 0.0
    %2017 = vmatprep.subr.mxu0 0.0
    %2018 = vmatpush1.msra.mxu0 %v1987
    %2019 = vmatprep.subr.mxu0 0.0
    %2020 = vmatpush1.msra.mxu0 %v1986
    %2021 = vmatprep.subr.mxu0 0.0
    %2022 = vmatpush1.msra.mxu0 %v1985
    %2023 = vmatprep.subr.mxu0 0.0
    %2024 = vmatpush1.msra.mxu0 %v1984
    %2025 = vmatprep.subr.mxu0 0.0
    %2026 = vmatpush1.msra.mxu0 %v1983
    %2027 = vmatprep.subr.mxu0 0.0
    %2028 = vmatpush1.msra.mxu0 %v1982
    %2029 = vmatprep.subr.mxu0 0.0
    %2030 = vmatpush1.msra.mxu0 %v1981
    %2031 = vmatprep.subr.mxu0 0.0
    %2032 = vmatpush1.msra.mxu0 %v1980
    %2033 = vmatprep.subr.mxu0 0.0
    %2034 = vmatpush2.msra.mxu0 0.0
    %2035 = vmatprep.subr.mxu0 0.0
    %2036 = vmatpush2.msra.mxu0 0.0
    %2037 = vmatprep.subr.mxu0 0.0
    %2038 = vmatpush2.msra.mxu0 0.0
    %2039 = vmatprep.subr.mxu0 0.0
    %2040 = vmatpush2.msra.mxu0 0.0
    %2041 = vmatprep.subr.mxu0 0.0
    %2042 = vmatpush2.msra.mxu0 0.0
    %2043 = vmatprep.subr.mxu0 0.0
    %2044 = vmatpush2.msra.mxu0 0.0
    %2045 = vmatprep.subr.mxu0 0.0
    %2046 = vmatpush2.msra.mxu0 0.0
    %2047 = vmatprep.subr.mxu0 0.0
    %2048 = vmatpush2.msra.mxu0 0.0
    %2049 = vmatprep.subr.mxu0 0.0
    %2050 = vmatpush2.msra.mxu0 0.0
    %2051 = vmatprep.subr.mxu0 0.0
    %2052 = vmatpush2.msra.mxu0 0.0
    %2053 = vmatprep.subr.mxu0 0.0
    %2054 = vmatpush2.msra.mxu0 0.0
    %2055 = vmatprep.subr.mxu0 0.0
    %2056 = vmatpush2.msra.mxu0 0.0
    %2057 = vmatprep.subr.mxu0 0.0
    %2058 = vmatpush2.msra.mxu0 0.0
    %2059 = vmatprep.subr.mxu0 0.0
    %2060 = vmatpush2.msra.mxu0 0.0
    %2061 = vmatprep.subr.mxu0 0.0
    %2062 = vmatpush2.msra.mxu0 0.0
    %2063 = vmatprep.subr.mxu0 0.0
    %2064 = vmatpush2.msra.mxu0 0.0
    %2065 = vmatprep.mubr.f32.mxu0 0.0
    %2066 = vmatmul.mubr.f32.gmra.mxu0 %v1990
    %v2067 = vpop.f32.mrf.mxu0
    %v2068 = vadd.f32 0.0, %v2067
    %v2069 = vpop.f32.mrf.mxu0
    %2070 = vmatprep.mubr.f32.mxu0 0.0
    %2071 = vmatmul.mubr.f32.gmra.mxu0 %v1993
    %v2072 = vpop.f32.mrf.mxu0
    %v2073 = vadd.f32 0.0, %v2072
    %v2074 = vpop.f32.mrf.mxu0
    %2075 = vmatprep.mubr.f32.mxu0 0.0
    %2076 = vmatmul.mubr.f32.gmra.mxu0 %v1996
    %v2077 = vpop.f32.mrf.mxu0
    %v2078 = vadd.f32 0.0, %v2077
    %v2079 = vpop.f32.mrf.mxu0
    %2080 = vmatprep.mubr.f32.mxu0 0.0
    %2081 = vmatmul.mubr.f32.gmra.mxu0 %v1999
    %v2082 = vpop.f32.mrf.mxu0
    %v2083 = vadd.f32 0.0, %v2082
    %v2084 = vpop.f32.mrf.mxu0
    %2085 = vdwg.mxu0
    %v2086 = vadd.f32 %v1718, %v2068
    %v2087 = vadd.f32 %v1719, %v2073
    %v2088 = vadd.f32 %v1720, %v2078
    %v2089 = vadd.f32 %v1721, %v2083
    %2090 = vst.msk [vmem:[#allocation11] sm:$0xff] %vm121, %v2086
    %2091 = vst.msk [vmem:[#allocation11 + $0x8] sm:$0xff] %vm121, %v2087
    %2092 = vst.msk [vmem:[#allocation11 + $0x10] sm:$0xff] %vm121, %v2088
    %2093 = vst.msk [vmem:[#allocation11 + $0x18] sm:$0xff] %vm121, %v2089
    // Predicated region
    $region74: #{encoder_block.1} parent=1 // pred_check
      _
    $region75: #{encoder_block.1} parent=1 // pred_check_branch
      %2095 = sbr.rel (0) target = $region77
    $region76: #{encoder_block.1} parent=1 // pred_region
      %s2097 = ssub.s32 512, 512
      %2098 = vsyncadd [#allocation4], %s2097
      %s2099 = sshll.u32 [#allocation11], 4
      %s2100 = int_to_ptr.vmem [resolvable:$true] %s2099
      %2105 = dma.vmem_to_hbm [thread:$0]  %s2100, 512, %s13, [#allocation4], 128, 128, 8
    $region77: #{encoder_block.1} parent=1 // pred_fallthru
      _
    // Predicated region
    $region78: #{encoder_block.1} parent=1 // pred_check
      _
    $region79: #{encoder_block.1} parent=1 // pred_check_branch
      %2107 = sbr.rel (0) target = $region81
    $region80: #{encoder_block.1} parent=1 // pred_region
      %2108 = dma.done [#allocation4], 512
    $region81: #{encoder_block.1} parent=1 // pred_fallthru
      _
    %2109 = vsyncpa [#allocation3], 1
    %2110 = vsyncpa [#allocation6], 1
    %2111 = vsyncpa [#allocation9], 1
    %2112 = vsyncpa [#allocation4], 1

</llo_original>
